<compile_context>
chip_gen: v5e
topology: v5e:2x2
jax: 0.10.0
libtpu: 0.0.40
codegen_flags: <defaults>
</compile_context>

<pallas_src>
import math
from functools import partial

import jax
import jax.numpy as jnp
from jax import lax
from jax.experimental import pallas as pl
from jax.experimental.pallas import tpu as pltpu

LN_EPS = 1e-5  # PyTorch nn.LayerNorm default


def _layer_norm(x, g, b):
    mu = jnp.mean(x, axis=-1, keepdims=True)
    var = jnp.mean((x - mu) ** 2, axis=-1, keepdims=True)
    return (x - mu) * lax.rsqrt(var + LN_EPS) * g + b


def _dot_nt(a, b):
    """a @ b.T contracting the last dim of both operands, f32 accumulate (MXU)."""
    return lax.dot_general(a, b, (((1,), (1,)), ((), ())),
                           preferred_element_type=jnp.float32)


def decoder_stack_kernel(emb_ref, mask_ref, wqkv_ref, bqkv_ref, wo_ref,
                         w1_ref, b1_ref, w2_ref, vecs_ref, final_ref,
                         out_ref, resid_ref, bias_ref, embbf_ref, *, heads):
    """Fused decoder stack.  Grid = (batch_block, layer); residual stream in VMEM.

    PyTorch loop body per layer (attention always reads the ORIGINAL embedding):
      out = SelfAttent(embedding, mask)
      out = LN(dropout(out)) + residual
      out = LN(dropout(W2 relu(W1 out))) + out
    Final LayerNorm applied on the last layer iteration.
    """
    layer = pl.program_id(1)
    Bt, S, D = emb_ref.shape
    H = heads
    dq = D // H
    M = Bt * S
    bf = jnp.bfloat16

    @pl.when(layer == 0)
    def _init():
        emb = emb_ref[...].reshape(M, D)                       # (M, D) f32
        resid_ref[...] = emb                                   # residual stream = embedding
        embbf_ref[...] = emb.astype(bf)                        # cached bf16 activation
        bias_ref[...] = jnp.where(mask_ref[...] == 0,          # additive mask bias (once)
                                  jnp.float32(-1e9), jnp.float32(0.0))

    emb_bf = embbf_ref[...]                                    # (M, D) bf16

    # ---- fused QKV projection: one (M, D) @ (D, 3D) MXU pass ----
    # 1/sqrt(dq) is already folded into Wq / bq at pack time.
    qkv = jnp.dot(emb_bf, wqkv_ref[0],
                  preferred_element_type=jnp.float32) + bqkv_ref[0]   # (M, 3D) f32
    qkv_bf = qkv.astype(bf)

    # ---- per-(batch, head) attention; scores stay f32 before the mask add ----
    ctx_rows = []
    for b in range(Bt):
        bias_b = bias_ref[b]                                   # (S, S) f32
        r0 = b * S
        ctx_heads = []
        for h in range(H):
            c0 = h * dq
            q_h = qkv_bf[r0:r0 + S, c0:c0 + dq]                # (S, dq) bf16
            k_h = qkv_bf[r0:r0 + S, D + c0:D + c0 + dq]
            v_h = qkv_bf[r0:r0 + S, 2 * D + c0:2 * D + c0 + dq]
            s_h = _dot_nt(q_h, k_h) + bias_b                   # (S, S) f32
            s_h = s_h - jnp.max(s_h, axis=-1, keepdims=True)   # stable softmax
            p_h = jnp.exp(s_h)
            p_h = p_h * pl.reciprocal(jnp.sum(p_h, axis=-1, keepdims=True), approx=True)
            ctx_heads.append(jnp.dot(p_h.astype(bf), v_h,
                                     preferred_element_type=jnp.float32))  # (S, dq)
        ctx_rows.append(jnp.concatenate(ctx_heads, axis=-1))   # (S, D) == concat of heads
    ctx = ctx_rows[0] if Bt == 1 else jnp.concatenate(ctx_rows, axis=0)    # (M, D) f32

    vecs = vecs_ref[0]                                         # (6, D): bo,g1,bt1,g2,bt2,b2
    bo, g1, bt1 = vecs[0:1], vecs[1:2], vecs[2:3]
    g2, bt2, b2 = vecs[3:4], vecs[4:5], vecs[5:6]

    # ---- output projection: one (M, D) @ (D, D) matmul (== concat-heads @ Wo) ----
    attn = jnp.dot(ctx.astype(bf), wo_ref[0],
                   preferred_element_type=jnp.float32) + bo    # (M, D) f32

    # Dropout(p=0.1) is identity in eval mode.
    out = _layer_norm(attn, g1, bt1) + resid_ref[...]

    # ---- feed-forward ----
    h1 = jnp.dot(out.astype(bf), w1_ref[0],
                 preferred_element_type=jnp.float32) + b1_ref[0]   # (M, 4D)
    h1 = jnp.maximum(h1, 0.0)
    h2 = jnp.dot(h1.astype(bf), w2_ref[0],
                 preferred_element_type=jnp.float32) + b2          # (M, D)
    out = _layer_norm(h2, g2, bt2) + out

    resid_ref[...] = out

    @pl.when(layer == pl.num_programs(1) - 1)
    def _finalize():
        fin = final_ref[...]                                   # (2, D): final gamma/beta
        out_ref[...] = _layer_norm(out, fin[0:1], fin[1:2]).reshape(Bt, S, D)


# ---------------- host-side packing of per-layer parameters ----------------

def pack_params(layer_params, final_gamma, final_beta, *, d_query):
    inv_s = jnp.float32(1.0 / math.sqrt(d_query))
    bf = jnp.bfloat16
    # Fused QKV weight (heads stay column-contiguous, same as nn.Linear + view):
    wqkv = jnp.stack([jnp.concatenate([p["wq"] * inv_s, p["wk"], p["wv"]], axis=1)
                      for p in layer_params]).astype(bf)            # (L, D, 3D)
    bqkv = jnp.stack([jnp.concatenate([p["bq"] * inv_s, p["bk"], p["bv"]], axis=1)
                      for p in layer_params])                        # (L, 1, 3D) f32
    wo = jnp.stack([p["wo"] for p in layer_params]).astype(bf)       # (L, D, D)
    w1 = jnp.stack([p["w1"] for p in layer_params]).astype(bf)       # (L, D, 4D)
    b1 = jnp.stack([p["b1"] for p in layer_params])                  # (L, 1, 4D) f32
    w2 = jnp.stack([p["w2"] for p in layer_params]).astype(bf)       # (L, 4D, D)
    vecs = jnp.stack([jnp.concatenate(
        [p["bo"], p["g1"], p["bt1"], p["g2"], p["bt2"], p["b2"]], axis=0)
        for p in layer_params])                                      # (L, 6, D) f32
    final = jnp.concatenate([final_gamma, final_beta], axis=0)       # (2, D) f32
    return wqkv, bqkv, wo, w1, b1, w2, vecs, final


def _vmem_limit_bytes(Bt, S, D):
    """Rough double-buffered footprint estimate (bytes) with 2x headroom."""
    w_bytes = (3 * D * D + D * D + 4 * D * D + 4 * D * D) * 2        # bf16 weights / layer
    w_bytes += (3 * D + 4 * D + 6 * D) * 4                           # biases / vectors
    act = Bt * S * D * 4 + Bt * S * S * 4 + Bt * S * D * 4 + 2 * D * 4
    scratch = Bt * S * D * 4 + Bt * S * S * 4 + Bt * S * D * 2
    inter = Bt * S * (3 * D + 4 * D + 4 * D) * 4                     # qkv / h1 temporaries
    est = 2 * w_bytes + 2 * act + scratch + inter
    return int(min(max(2 * est, 32 * 1024 * 1024), 64 * 1024 * 1024))


def decoder_forward(emb, mask, layer_params, final_gamma, final_beta,
                    *, heads, d_query, batch_block=None):
    B, S, D = emb.shape
    L = len(layer_params)
    Bt = B if batch_block is None else batch_block
    assert B % Bt == 0, "batch must be divisible by batch_block"
    assert D == heads * d_query

    wqkv, bqkv, wo, w1, b1, w2, vecs, final = pack_params(
        layer_params, final_gamma, final_beta, d_query=d_query)

    kernel = partial(decoder_stack_kernel, heads=heads)
    return pl.pallas_call(
        kernel,
        out_shape=jax.ShapeDtypeStruct((B, S, D), jnp.float32),
        grid=(B // Bt, L),
        in_specs=[
            pl.BlockSpec((Bt, S, D), lambda b, l: (b, 0, 0)),          # embedding
            pl.BlockSpec((Bt, S, S), lambda b, l: (b, 0, 0)),          # mask
            pl.BlockSpec((1, D, 3 * D), lambda b, l: (l, 0, 0)),       # Wq|Wk|Wv (fused)
            pl.BlockSpec((1, 1, 3 * D), lambda b, l: (l, 0, 0)),       # bq|bk|bv (fused)
            pl.BlockSpec((1, D, D), lambda b, l: (l, 0, 0)),           # Wo
            pl.BlockSpec((1, D, 4 * D), lambda b, l: (l, 0, 0)),       # W1
            pl.BlockSpec((1, 1, 4 * D), lambda b, l: (l, 0, 0)),       # b1
            pl.BlockSpec((1, 4 * D, D), lambda b, l: (l, 0, 0)),       # W2
            pl.BlockSpec((1, 6, D), lambda b, l: (l, 0, 0)),           # packed per-layer vectors
            pl.BlockSpec((2, D), lambda b, l: (0, 0)),                 # final LN gamma/beta
        ],
        out_specs=pl.BlockSpec((Bt, S, D), lambda b, l: (b, 0, 0)),
        scratch_shapes=[
            pltpu.VMEM((Bt * S, D), jnp.float32),                      # residual stream
            pltpu.VMEM((Bt, S, S), jnp.float32),                       # cached mask bias
            pltpu.VMEM((Bt * S, D), jnp.bfloat16),                     # cached bf16 embedding
        ],
        compiler_params=pltpu.CompilerParams(
            dimension_semantics=("parallel", "arbitrary"),
            vmem_limit_bytes=_vmem_limit_bytes(Bt, S, D)),
    )(emb, mask, wqkv, bqkv, wo, w1, b1, w2, vecs, final)


# ---------------- parameter init (deterministic, synthetic) ----------------

def _linear(key, d_in, d_out):
    kw, kb = jax.random.split(key)
    w = jax.random.normal(kw, (d_in, d_out), jnp.float32) * (1.0 / math.sqrt(d_in))
    b = jax.random.normal(kb, (1, d_out), jnp.float32) * 0.01
    return w, b


def init_decoder_params(key, layers, d_model):
    params = []
    for i in range(layers):
        k = jax.random.fold_in(key, i)
        ks = jax.random.split(k, 6)
        wq, bq = _linear(ks[0], d_model, d_model)
        wk, bk = _linear(ks[1], d_model, d_model)
        wv, bv = _linear(ks[2], d_model, d_model)
        wo, bo = _linear(ks[3], d_model, d_model)
        w1, b1 = _linear(ks[4], d_model, 4 * d_model)
        w2, b2 = _linear(ks[5], 4 * d_model, d_model)
        params.append(dict(
            wq=wq, bq=bq, wk=wk, bk=bk, wv=wv, bv=bv, wo=wo, bo=bo,
            g1=jnp.ones((1, d_model), jnp.float32),
            bt1=jnp.zeros((1, d_model), jnp.float32),
            w1=w1, b1=b1, w2=w2, b2=b2,
            g2=jnp.ones((1, d_model), jnp.float32),
            bt2=jnp.zeros((1, d_model), jnp.float32),
        ))
    final_gamma = jnp.ones((1, d_model), jnp.float32)
    final_beta = jnp.zeros((1, d_model), jnp.float32)
    return params, final_gamma, final_beta


# ------- pure-JAX reference (mirrors the PyTorch forward; same mixed precision) -------

def reference_decoder(emb, mask, layer_params, final_gamma, final_beta, *, heads, d_query):
    B, S, D = emb.shape
    bf = jnp.bfloat16

    def mm(a, w):  # same bf16-operand / f32-accumulate convention as the kernel
        return jnp.dot(a.astype(bf), w.astype(bf), preferred_element_type=jnp.float32)

    def ln(x, g, b):
        mu = x.mean(-1, keepdims=True)
        var = ((x - mu) ** 2).mean(-1, keepdims=True)
        return (x - mu) / jnp.sqrt(var + LN_EPS) * g + b

    out = emb
    for p in layer_params:
        residual = out
        q = mm(emb, p["wq"]) + p["bq"]
        k = mm(emb, p["wk"]) + p["bk"]
        v = mm(emb, p["wv"]) + p["bv"]
        qh = q.reshape(B, S, heads, d_query).transpose(0, 2, 1, 3)
        kh = k.reshape(B, S, heads, d_query).transpose(0, 2, 1, 3)
        vh = v.reshape(B, S, heads, d_query).transpose(0, 2, 1, 3)
        scores = jnp.einsum("bhqe,bhke->bhqk", qh.astype(bf), kh.astype(bf),
                            preferred_element_type=jnp.float32) / math.sqrt(d_query)
        scores = jnp.where(mask[:, None] == 0, -1e9, scores)
        attn_w = jax.nn.softmax(scores, axis=-1)
        ctx = jnp.einsum("bhqk,bhke->bhqe", attn_w.astype(bf), vh.astype(bf),
                         preferred_element_type=jnp.float32)
        ctx = ctx.transpose(0, 2, 1, 3).reshape(B, S, D)
        a = mm(ctx, p["wo"]) + p["bo"]
        out = ln(a, p["g1"], p["bt1"]) + residual
        residual = out
        h = jnp.maximum(mm(out, p["w1"]) + p["b1"], 0.0)
        h = mm(h, p["w2"]) + p["b2"]
        out = ln(h, p["g2"], p["bt2"]) + residual
    return ln(out, final_gamma, final_beta)


if __name__ == "__main__":
    LAYERS = 2
    B, S = 2, 8
    HEADS, D_QUERY = 4, 8
    D_MODEL = HEADS * D_QUERY  # 32

    root = jax.random.PRNGKey(0)
    k_emb, k_par = jax.random.split(root)

    embedding = jax.random.normal(k_emb, (B, S, D_MODEL), jnp.float32)
    # Causal mask: 1 = attend, 0 = masked.
    mask = jnp.broadcast_to(jnp.tril(jnp.ones((S, S), jnp.int32)), (B, S, S))

    layer_params, final_gamma, final_beta = init_decoder_params(k_par, LAYERS, D_MODEL)

    # batch_block = B: whole batch flattened into the matmul M dimension (weights
    # streamed from HBM once per layer instead of once per batch element).
    out = decoder_forward(embedding, mask, layer_params, final_gamma, final_beta,
                          heads=HEADS, d_query=D_QUERY, batch_block=B)
    out = jax.block_until_ready(out)

    ref = reference_decoder(embedding, mask, layer_params, final_gamma, final_beta,
                            heads=HEADS, d_query=D_QUERY)
    assert out.shape == (B, S, D_MODEL)
    # Tolerance covers approx-reciprocal softmax, bf16 matmul reassociation and the
    # 1/sqrt(dq) scale folded into Wq before the bf16 cast.
    assert jnp.allclose(out, ref, rtol=3e-2, atol=3e-2), "mismatch vs reference"
    print("KERNEL_OK")
</pallas_src>

<mosaic_0001>
module attributes {stable_mosaic.version = 11 : i64} {
  func.func @decoder_stack_kernel(%arg0: i32, %arg1: i32, %arg2: memref<2x8x32xf32, #tpu.memory_space<vmem>>, %arg3: memref<2x8x8xi32, #tpu.memory_space<vmem>>, %arg4: memref<1x32x96xbf16, #tpu.memory_space<vmem>>, %arg5: memref<1x1x96xf32, #tpu.memory_space<vmem>>, %arg6: memref<1x32x32xbf16, #tpu.memory_space<vmem>>, %arg7: memref<1x32x128xbf16, #tpu.memory_space<vmem>>, %arg8: memref<1x1x128xf32, #tpu.memory_space<vmem>>, %arg9: memref<1x128x32xbf16, #tpu.memory_space<vmem>>, %arg10: memref<1x6x32xf32, #tpu.memory_space<vmem>>, %arg11: memref<2x32xf32, #tpu.memory_space<vmem>>, %arg12: memref<2x8x32xf32, #tpu.memory_space<vmem>>, %arg13: memref<16x32xf32, #tpu.memory_space<vmem>>, %arg14: memref<2x8x8xf32, #tpu.memory_space<vmem>>, %arg15: memref<16x32xbf16, #tpu.memory_space<vmem>>) attributes {dimension_semantics = [#tpu.dimension_semantics<parallel>, #tpu.dimension_semantics<arbitrary>], iteration_bounds = array<i64: 1, 2>, scalar_prefetch = 0 : i64, scratch_operands = 3 : i64, tpu.core_type = #tpu.core_type<tc>, window_params = [{transform_indices = @transform_0, window_bounds = array<i64: 2, 8, 32>}, {transform_indices = @transform_1, window_bounds = array<i64: 2, 8, 8>}, {transform_indices = @transform_2, window_bounds = array<i64: 1, 32, 96>}, {transform_indices = @transform_3, window_bounds = array<i64: 1, 1, 96>}, {transform_indices = @transform_4, window_bounds = array<i64: 1, 32, 32>}, {transform_indices = @transform_5, window_bounds = array<i64: 1, 32, 128>}, {transform_indices = @transform_6, window_bounds = array<i64: 1, 1, 128>}, {transform_indices = @transform_7, window_bounds = array<i64: 1, 128, 32>}, {transform_indices = @transform_8, window_bounds = array<i64: 1, 6, 32>}, {pipeline_mode = #tpu.pipeline_mode<synchronous>, transform_indices = @transform_9, window_bounds = array<i64: 2, 32>}, {transform_indices = @transform_10, window_bounds = array<i64: 2, 8, 32>}]} {
    %c0_i32 = arith.constant 0 : i32
    %0 = arith.cmpi eq, %arg1, %c0_i32 : i32
    %1 = arith.extui %0 : i1 to i32
    %c0_i32_0 = arith.constant 0 : i32
    %2 = arith.cmpi ne, %1, %c0_i32_0 : i32
    scf.if %2 {
      %c0_79 = arith.constant 0 : index
      %c0_80 = arith.constant 0 : index
      %c0_81 = arith.constant 0 : index
      %236 = vector.load %arg2[%c0_79, %c0_80, %c0_81] : memref<2x8x32xf32, #tpu.memory_space<vmem>>, vector<2x8x32xf32>
      %237 = vector.shape_cast %236 : vector<2x8x32xf32> to vector<16x32xf32>
      %c0_82 = arith.constant 0 : index
      %c0_83 = arith.constant 0 : index
      %238 = vector.load %arg13[%c0_82, %c0_83] : memref<16x32xf32, #tpu.memory_space<vmem>>, vector<16x32xf32>
      tpu.vector_store %arg13[%c0_82, %c0_83], %237 {strides = array<i32>} : memref<16x32xf32, #tpu.memory_space<vmem>>, vector<16x32xf32>,
      %239 = arith.truncf %237 : vector<16x32xf32> to vector<16x32xbf16>
      %c0_84 = arith.constant 0 : index
      %c0_85 = arith.constant 0 : index
      %240 = vector.load %arg15[%c0_84, %c0_85] : memref<16x32xbf16, #tpu.memory_space<vmem>>, vector<16x32xbf16>
      tpu.vector_store %arg15[%c0_84, %c0_85], %239 {strides = array<i32>} : memref<16x32xbf16, #tpu.memory_space<vmem>>, vector<16x32xbf16>,
      %c0_86 = arith.constant 0 : index
      %c0_87 = arith.constant 0 : index
      %c0_88 = arith.constant 0 : index
      %241 = vector.load %arg3[%c0_86, %c0_87, %c0_88] : memref<2x8x8xi32, #tpu.memory_space<vmem>>, vector<2x8x8xi32>
      %c0_i32_89 = arith.constant 0 : i32
      %242 = vector.broadcast %c0_i32_89 : i32 to vector<2x8x8xi32>
      %243 = arith.cmpi eq, %241, %242 : vector<2x8x8xi32>
      %cst_90 = arith.constant -1.000000e+09 : f32
      %cst_91 = arith.constant 0.000000e+00 : f32
      %244 = vector.broadcast %cst_90 : f32 to vector<2x8x8xf32>
      %245 = vector.broadcast %cst_91 : f32 to vector<2x8x8xf32>
      %246 = arith.select %243, %244, %245 : vector<2x8x8xi1>, vector<2x8x8xf32>
      %c0_92 = arith.constant 0 : index
      %c0_93 = arith.constant 0 : index
      %c0_94 = arith.constant 0 : index
      %247 = vector.load %arg14[%c0_92, %c0_93, %c0_94] : memref<2x8x8xf32, #tpu.memory_space<vmem>>, vector<2x8x8xf32>
      tpu.vector_store %arg14[%c0_92, %c0_93, %c0_94], %246 {strides = array<i32>} : memref<2x8x8xf32, #tpu.memory_space<vmem>>, vector<2x8x8xf32>,
    } else {
    }
    %c0 = arith.constant 0 : index
    %c0_1 = arith.constant 0 : index
    %3 = vector.load %arg15[%c0, %c0_1] : memref<16x32xbf16, #tpu.memory_space<vmem>>, vector<16x32xbf16>
    %c0_2 = arith.constant 0 : index
    %c0_3 = arith.constant 0 : index
    %c0_4 = arith.constant 0 : index
    %4 = vector.load %arg4[%c0_2, %c0_3, %c0_4] : memref<1x32x96xbf16, #tpu.memory_space<vmem>>, vector<1x32x96xbf16>
    %5 = vector.shape_cast %4 : vector<1x32x96xbf16> to vector<32x96xbf16>
    %cst = arith.constant dense<0.000000e+00> : vector<16x96xf32>
    %6 = tpu.matmul %3, %5, %cst {dimension_numbers = #tpu.dot_dimension_numbers<[1], [0], [0], [1], [0, 0, 1, 1], [], []>} : vector<16x32xbf16>, vector<32x96xbf16>, vector<16x96xf32> -> vector<16x96xf32>
    %c0_5 = arith.constant 0 : index
    %c0_6 = arith.constant 0 : index
    %c0_7 = arith.constant 0 : index
    %7 = vector.load %arg5[%c0_5, %c0_6, %c0_7] : memref<1x1x96xf32, #tpu.memory_space<vmem>>, vector<1x1x96xf32>
    %8 = vector.shape_cast %7 : vector<1x1x96xf32> to vector<1x96xf32>
    %9 = vector.broadcast %8 : vector<1x96xf32> to vector<16x96xf32>
    %10 = arith.addf %6, %9 : vector<16x96xf32>
    %11 = arith.truncf %10 : vector<16x96xf32> to vector<16x96xbf16>
    %c0_8 = arith.constant 0 : index
    %c0_9 = arith.constant 0 : index
    %c0_10 = arith.constant 0 : index
    %12 = vector.load %arg14[%c0_8, %c0_9, %c0_10] : memref<2x8x8xf32, #tpu.memory_space<vmem>>, vector<1x8x8xf32>
    %13 = vector.shape_cast %12 : vector<1x8x8xf32> to vector<8x8xf32>
    %14 = vector.extract_strided_slice %11 {offsets = [0, 0], sizes = [8, 8], strides = [1, 1]} : vector<16x96xbf16> to vector<8x8xbf16>
    %15 = vector.extract_strided_slice %11 {offsets = [0, 32], sizes = [8, 8], strides = [1, 1]} : vector<16x96xbf16> to vector<8x8xbf16>
    %16 = vector.extract_strided_slice %11 {offsets = [0, 64], sizes = [8, 8], strides = [1, 1]} : vector<16x96xbf16> to vector<8x8xbf16>
    %cst_11 = arith.constant dense<0.000000e+00> : vector<8x8xf32>
    %17 = tpu.matmul %14, %15, %cst_11 {dimension_numbers = #tpu.dot_dimension_numbers<[1], [1], [0], [0], [0, 0, 1, 0], [], []>} : vector<8x8xbf16>, vector<8x8xbf16>, vector<8x8xf32> -> vector<8x8xf32>
    %18 = arith.addf %17, %13 : vector<8x8xf32>
    %cst_12 = arith.constant dense<0xFF800000> : vector<8xf32>
    %19 = vector.multi_reduction <maximumf>, %18, %cst_12 [1] : vector<8x8xf32> to vector<8xf32>
    %20 = vector.shape_cast %19 : vector<8xf32> to vector<8x1xf32>
    %21 = vector.broadcast %20 : vector<8x1xf32> to vector<8x8xf32>
    %22 = arith.subf %18, %21 : vector<8x8xf32>
    %23 = math.exp %22 : vector<8x8xf32>
    %cst_13 = arith.constant dense<0.000000e+00> : vector<8xf32>
    %24 = vector.multi_reduction <add>, %23, %cst_13 [1] : vector<8x8xf32> to vector<8xf32>
    %25 = vector.shape_cast %24 : vector<8xf32> to vector<8x1xf32>
    %26 = tpu.reciprocal %25 {approx = true} : vector<8x1xf32> -> vector<8x1xf32>
    %27 = vector.broadcast %26 : vector<8x1xf32> to vector<8x8xf32>
    %28 = arith.mulf %23, %27 : vector<8x8xf32>
    %29 = arith.truncf %28 : vector<8x8xf32> to vector<8x8xbf16>
    %cst_14 = arith.constant dense<0.000000e+00> : vector<8x8xf32>
    %30 = tpu.matmul %29, %16, %cst_14 {dimension_numbers = #tpu.dot_dimension_numbers<[1], [0], [0], [1], [0, 0, 1, 1], [], []>} : vector<8x8xbf16>, vector<8x8xbf16>, vector<8x8xf32> -> vector<8x8xf32>
    %31 = vector.extract_strided_slice %11 {offsets = [0, 8], sizes = [8, 8], strides = [1, 1]} : vector<16x96xbf16> to vector<8x8xbf16>
    %32 = vector.extract_strided_slice %11 {offsets = [0, 40], sizes = [8, 8], strides = [1, 1]} : vector<16x96xbf16> to vector<8x8xbf16>
    %33 = vector.extract_strided_slice %11 {offsets = [0, 72], sizes = [8, 8], strides = [1, 1]} : vector<16x96xbf16> to vector<8x8xbf16>
    %cst_15 = arith.constant dense<0.000000e+00> : vector<8x8xf32>
    %34 = tpu.matmul %31, %32, %cst_15 {dimension_numbers = #tpu.dot_dimension_numbers<[1], [1], [0], [0], [0, 0, 1, 0], [], []>} : vector<8x8xbf16>, vector<8x8xbf16>, vector<8x8xf32> -> vector<8x8xf32>
    %35 = arith.addf %34, %13 : vector<8x8xf32>
    %cst_16 = arith.constant dense<0xFF800000> : vector<8xf32>
    %36 = vector.multi_reduction <maximumf>, %35, %cst_16 [1] : vector<8x8xf32> to vector<8xf32>
    %37 = vector.shape_cast %36 : vector<8xf32> to vector<8x1xf32>
    %38 = vector.broadcast %37 : vector<8x1xf32> to vector<8x8xf32>
    %39 = arith.subf %35, %38 : vector<8x8xf32>
    %40 = math.exp %39 : vector<8x8xf32>
    %cst_17 = arith.constant dense<0.000000e+00> : vector<8xf32>
    %41 = vector.multi_reduction <add>, %40, %cst_17 [1] : vector<8x8xf32> to vector<8xf32>
    %42 = vector.shape_cast %41 : vector<8xf32> to vector<8x1xf32>
    %43 = tpu.reciprocal %42 {approx = true} : vector<8x1xf32> -> vector<8x1xf32>
    %44 = vector.broadcast %43 : vector<8x1xf32> to vector<8x8xf32>
    %45 = arith.mulf %40, %44 : vector<8x8xf32>
    %46 = arith.truncf %45 : vector<8x8xf32> to vector<8x8xbf16>
    %cst_18 = arith.constant dense<0.000000e+00> : vector<8x8xf32>
    %47 = tpu.matmul %46, %33, %cst_18 {dimension_numbers = #tpu.dot_dimension_numbers<[1], [0], [0], [1], [0, 0, 1, 1], [], []>} : vector<8x8xbf16>, vector<8x8xbf16>, vector<8x8xf32> -> vector<8x8xf32>
    %48 = vector.extract_strided_slice %11 {offsets = [0, 16], sizes = [8, 8], strides = [1, 1]} : vector<16x96xbf16> to vector<8x8xbf16>
    %49 = vector.extract_strided_slice %11 {offsets = [0, 48], sizes = [8, 8], strides = [1, 1]} : vector<16x96xbf16> to vector<8x8xbf16>
    %50 = vector.extract_strided_slice %11 {offsets = [0, 80], sizes = [8, 8], strides = [1, 1]} : vector<16x96xbf16> to vector<8x8xbf16>
    %cst_19 = arith.constant dense<0.000000e+00> : vector<8x8xf32>
    %51 = tpu.matmul %48, %49, %cst_19 {dimension_numbers = #tpu.dot_dimension_numbers<[1], [1], [0], [0], [0, 0, 1, 0], [], []>} : vector<8x8xbf16>, vector<8x8xbf16>, vector<8x8xf32> -> vector<8x8xf32>
    %52 = arith.addf %51, %13 : vector<8x8xf32>
    %cst_20 = arith.constant dense<0xFF800000> : vector<8xf32>
    %53 = vector.multi_reduction <maximumf>, %52, %cst_20 [1] : vector<8x8xf32> to vector<8xf32>
    %54 = vector.shape_cast %53 : vector<8xf32> to vector<8x1xf32>
    %55 = vector.broadcast %54 : vector<8x1xf32> to vector<8x8xf32>
    %56 = arith.subf %52, %55 : vector<8x8xf32>
    %57 = math.exp %56 : vector<8x8xf32>
    %cst_21 = arith.constant dense<0.000000e+00> : vector<8xf32>
    %58 = vector.multi_reduction <add>, %57, %cst_21 [1] : vector<8x8xf32> to vector<8xf32>
    %59 = vector.shape_cast %58 : vector<8xf32> to vector<8x1xf32>
    %60 = tpu.reciprocal %59 {approx = true} : vector<8x1xf32> -> vector<8x1xf32>
    %61 = vector.broadcast %60 : vector<8x1xf32> to vector<8x8xf32>
    %62 = arith.mulf %57, %61 : vector<8x8xf32>
    %63 = arith.truncf %62 : vector<8x8xf32> to vector<8x8xbf16>
    %cst_22 = arith.constant dense<0.000000e+00> : vector<8x8xf32>
    %64 = tpu.matmul %63, %50, %cst_22 {dimension_numbers = #tpu.dot_dimension_numbers<[1], [0], [0], [1], [0, 0, 1, 1], [], []>} : vector<8x8xbf16>, vector<8x8xbf16>, vector<8x8xf32> -> vector<8x8xf32>
    %65 = vector.extract_strided_slice %11 {offsets = [0, 24], sizes = [8, 8], strides = [1, 1]} : vector<16x96xbf16> to vector<8x8xbf16>
    %66 = vector.extract_strided_slice %11 {offsets = [0, 56], sizes = [8, 8], strides = [1, 1]} : vector<16x96xbf16> to vector<8x8xbf16>
    %67 = vector.extract_strided_slice %11 {offsets = [0, 88], sizes = [8, 8], strides = [1, 1]} : vector<16x96xbf16> to vector<8x8xbf16>
    %cst_23 = arith.constant dense<0.000000e+00> : vector<8x8xf32>
    %68 = tpu.matmul %65, %66, %cst_23 {dimension_numbers = #tpu.dot_dimension_numbers<[1], [1], [0], [0], [0, 0, 1, 0], [], []>} : vector<8x8xbf16>, vector<8x8xbf16>, vector<8x8xf32> -> vector<8x8xf32>
    %69 = arith.addf %68, %13 : vector<8x8xf32>
    %cst_24 = arith.constant dense<0xFF800000> : vector<8xf32>
    %70 = vector.multi_reduction <maximumf>, %69, %cst_24 [1] : vector<8x8xf32> to vector<8xf32>
    %71 = vector.shape_cast %70 : vector<8xf32> to vector<8x1xf32>
    %72 = vector.broadcast %71 : vector<8x1xf32> to vector<8x8xf32>
    %73 = arith.subf %69, %72 : vector<8x8xf32>
    %74 = math.exp %73 : vector<8x8xf32>
    %cst_25 = arith.constant dense<0.000000e+00> : vector<8xf32>
    %75 = vector.multi_reduction <add>, %74, %cst_25 [1] : vector<8x8xf32> to vector<8xf32>
    %76 = vector.shape_cast %75 : vector<8xf32> to vector<8x1xf32>
    %77 = tpu.reciprocal %76 {approx = true} : vector<8x1xf32> -> vector<8x1xf32>
    %78 = vector.broadcast %77 : vector<8x1xf32> to vector<8x8xf32>
    %79 = arith.mulf %74, %78 : vector<8x8xf32>
    %80 = arith.truncf %79 : vector<8x8xf32> to vector<8x8xbf16>
    %cst_26 = arith.constant dense<0.000000e+00> : vector<8x8xf32>
    %81 = tpu.matmul %80, %67, %cst_26 {dimension_numbers = #tpu.dot_dimension_numbers<[1], [0], [0], [1], [0, 0, 1, 1], [], []>} : vector<8x8xbf16>, vector<8x8xbf16>, vector<8x8xf32> -> vector<8x8xf32>
    %82 = tpu.concatenate %30, %47, %64, %81 in 1 : vector<8x8xf32>, vector<8x8xf32>, vector<8x8xf32>, vector<8x8xf32> -> vector<8x32xf32>
    %c1 = arith.constant 1 : index
    %c0_27 = arith.constant 0 : index
    %c0_28 = arith.constant 0 : index
    %83 = vector.load %arg14[%c1, %c0_27, %c0_28] : memref<2x8x8xf32, #tpu.memory_space<vmem>>, vector<1x8x8xf32>
    %84 = vector.shape_cast %83 : vector<1x8x8xf32> to vector<8x8xf32>
    %85 = vector.extract_strided_slice %11 {offsets = [8, 0], sizes = [8, 8], strides = [1, 1]} : vector<16x96xbf16> to vector<8x8xbf16>
    %86 = vector.extract_strided_slice %11 {offsets = [8, 32], sizes = [8, 8], strides = [1, 1]} : vector<16x96xbf16> to vector<8x8xbf16>
    %87 = vector.extract_strided_slice %11 {offsets = [8, 64], sizes = [8, 8], strides = [1, 1]} : vector<16x96xbf16> to vector<8x8xbf16>
    %cst_29 = arith.constant dense<0.000000e+00> : vector<8x8xf32>
    %88 = tpu.matmul %85, %86, %cst_29 {dimension_numbers = #tpu.dot_dimension_numbers<[1], [1], [0], [0], [0, 0, 1, 0], [], []>} : vector<8x8xbf16>, vector<8x8xbf16>, vector<8x8xf32> -> vector<8x8xf32>
    %89 = arith.addf %88, %84 : vector<8x8xf32>
    %cst_30 = arith.constant dense<0xFF800000> : vector<8xf32>
    %90 = vector.multi_reduction <maximumf>, %89, %cst_30 [1] : vector<8x8xf32> to vector<8xf32>
    %91 = vector.shape_cast %90 : vector<8xf32> to vector<8x1xf32>
    %92 = vector.broadcast %91 : vector<8x1xf32> to vector<8x8xf32>
    %93 = arith.subf %89, %92 : vector<8x8xf32>
    %94 = math.exp %93 : vector<8x8xf32>
    %cst_31 = arith.constant dense<0.000000e+00> : vector<8xf32>
    %95 = vector.multi_reduction <add>, %94, %cst_31 [1] : vector<8x8xf32> to vector<8xf32>
    %96 = vector.shape_cast %95 : vector<8xf32> to vector<8x1xf32>
    %97 = tpu.reciprocal %96 {approx = true} : vector<8x1xf32> -> vector<8x1xf32>
    %98 = vector.broadcast %97 : vector<8x1xf32> to vector<8x8xf32>
    %99 = arith.mulf %94, %98 : vector<8x8xf32>
    %100 = arith.truncf %99 : vector<8x8xf32> to vector<8x8xbf16>
    %cst_32 = arith.constant dense<0.000000e+00> : vector<8x8xf32>
    %101 = tpu.matmul %100, %87, %cst_32 {dimension_numbers = #tpu.dot_dimension_numbers<[1], [0], [0], [1], [0, 0, 1, 1], [], []>} : vector<8x8xbf16>, vector<8x8xbf16>, vector<8x8xf32> -> vector<8x8xf32>
    %102 = vector.extract_strided_slice %11 {offsets = [8, 8], sizes = [8, 8], strides = [1, 1]} : vector<16x96xbf16> to vector<8x8xbf16>
    %103 = vector.extract_strided_slice %11 {offsets = [8, 40], sizes = [8, 8], strides = [1, 1]} : vector<16x96xbf16> to vector<8x8xbf16>
    %104 = vector.extract_strided_slice %11 {offsets = [8, 72], sizes = [8, 8], strides = [1, 1]} : vector<16x96xbf16> to vector<8x8xbf16>
    %cst_33 = arith.constant dense<0.000000e+00> : vector<8x8xf32>
    %105 = tpu.matmul %102, %103, %cst_33 {dimension_numbers = #tpu.dot_dimension_numbers<[1], [1], [0], [0], [0, 0, 1, 0], [], []>} : vector<8x8xbf16>, vector<8x8xbf16>, vector<8x8xf32> -> vector<8x8xf32>
    %106 = arith.addf %105, %84 : vector<8x8xf32>
    %cst_34 = arith.constant dense<0xFF800000> : vector<8xf32>
    %107 = vector.multi_reduction <maximumf>, %106, %cst_34 [1] : vector<8x8xf32> to vector<8xf32>
    %108 = vector.shape_cast %107 : vector<8xf32> to vector<8x1xf32>
    %109 = vector.broadcast %108 : vector<8x1xf32> to vector<8x8xf32>
    %110 = arith.subf %106, %109 : vector<8x8xf32>
    %111 = math.exp %110 : vector<8x8xf32>
    %cst_35 = arith.constant dense<0.000000e+00> : vector<8xf32>
    %112 = vector.multi_reduction <add>, %111, %cst_35 [1] : vector<8x8xf32> to vector<8xf32>
    %113 = vector.shape_cast %112 : vector<8xf32> to vector<8x1xf32>
    %114 = tpu.reciprocal %113 {approx = true} : vector<8x1xf32> -> vector<8x1xf32>
    %115 = vector.broadcast %114 : vector<8x1xf32> to vector<8x8xf32>
    %116 = arith.mulf %111, %115 : vector<8x8xf32>
    %117 = arith.truncf %116 : vector<8x8xf32> to vector<8x8xbf16>
    %cst_36 = arith.constant dense<0.000000e+00> : vector<8x8xf32>
    %118 = tpu.matmul %117, %104, %cst_36 {dimension_numbers = #tpu.dot_dimension_numbers<[1], [0], [0], [1], [0, 0, 1, 1], [], []>} : vector<8x8xbf16>, vector<8x8xbf16>, vector<8x8xf32> -> vector<8x8xf32>
    %119 = vector.extract_strided_slice %11 {offsets = [8, 16], sizes = [8, 8], strides = [1, 1]} : vector<16x96xbf16> to vector<8x8xbf16>
    %120 = vector.extract_strided_slice %11 {offsets = [8, 48], sizes = [8, 8], strides = [1, 1]} : vector<16x96xbf16> to vector<8x8xbf16>
    %121 = vector.extract_strided_slice %11 {offsets = [8, 80], sizes = [8, 8], strides = [1, 1]} : vector<16x96xbf16> to vector<8x8xbf16>
    %cst_37 = arith.constant dense<0.000000e+00> : vector<8x8xf32>
    %122 = tpu.matmul %119, %120, %cst_37 {dimension_numbers = #tpu.dot_dimension_numbers<[1], [1], [0], [0], [0, 0, 1, 0], [], []>} : vector<8x8xbf16>, vector<8x8xbf16>, vector<8x8xf32> -> vector<8x8xf32>
    %123 = arith.addf %122, %84 : vector<8x8xf32>
    %cst_38 = arith.constant dense<0xFF800000> : vector<8xf32>
    %124 = vector.multi_reduction <maximumf>, %123, %cst_38 [1] : vector<8x8xf32> to vector<8xf32>
    %125 = vector.shape_cast %124 : vector<8xf32> to vector<8x1xf32>
    %126 = vector.broadcast %125 : vector<8x1xf32> to vector<8x8xf32>
    %127 = arith.subf %123, %126 : vector<8x8xf32>
    %128 = math.exp %127 : vector<8x8xf32>
    %cst_39 = arith.constant dense<0.000000e+00> : vector<8xf32>
    %129 = vector.multi_reduction <add>, %128, %cst_39 [1] : vector<8x8xf32> to vector<8xf32>
    %130 = vector.shape_cast %129 : vector<8xf32> to vector<8x1xf32>
    %131 = tpu.reciprocal %130 {approx = true} : vector<8x1xf32> -> vector<8x1xf32>
    %132 = vector.broadcast %131 : vector<8x1xf32> to vector<8x8xf32>
    %133 = arith.mulf %128, %132 : vector<8x8xf32>
    %134 = arith.truncf %133 : vector<8x8xf32> to vector<8x8xbf16>
    %cst_40 = arith.constant dense<0.000000e+00> : vector<8x8xf32>
    %135 = tpu.matmul %134, %121, %cst_40 {dimension_numbers = #tpu.dot_dimension_numbers<[1], [0], [0], [1], [0, 0, 1, 1], [], []>} : vector<8x8xbf16>, vector<8x8xbf16>, vector<8x8xf32> -> vector<8x8xf32>
    %136 = vector.extract_strided_slice %11 {offsets = [8, 24], sizes = [8, 8], strides = [1, 1]} : vector<16x96xbf16> to vector<8x8xbf16>
    %137 = vector.extract_strided_slice %11 {offsets = [8, 56], sizes = [8, 8], strides = [1, 1]} : vector<16x96xbf16> to vector<8x8xbf16>
    %138 = vector.extract_strided_slice %11 {offsets = [8, 88], sizes = [8, 8], strides = [1, 1]} : vector<16x96xbf16> to vector<8x8xbf16>
    %cst_41 = arith.constant dense<0.000000e+00> : vector<8x8xf32>
    %139 = tpu.matmul %136, %137, %cst_41 {dimension_numbers = #tpu.dot_dimension_numbers<[1], [1], [0], [0], [0, 0, 1, 0], [], []>} : vector<8x8xbf16>, vector<8x8xbf16>, vector<8x8xf32> -> vector<8x8xf32>
    %140 = arith.addf %139, %84 : vector<8x8xf32>
    %cst_42 = arith.constant dense<0xFF800000> : vector<8xf32>
    %141 = vector.multi_reduction <maximumf>, %140, %cst_42 [1] : vector<8x8xf32> to vector<8xf32>
    %142 = vector.shape_cast %141 : vector<8xf32> to vector<8x1xf32>
    %143 = vector.broadcast %142 : vector<8x1xf32> to vector<8x8xf32>
    %144 = arith.subf %140, %143 : vector<8x8xf32>
    %145 = math.exp %144 : vector<8x8xf32>
    %cst_43 = arith.constant dense<0.000000e+00> : vector<8xf32>
    %146 = vector.multi_reduction <add>, %145, %cst_43 [1] : vector<8x8xf32> to vector<8xf32>
    %147 = vector.shape_cast %146 : vector<8xf32> to vector<8x1xf32>
    %148 = tpu.reciprocal %147 {approx = true} : vector<8x1xf32> -> vector<8x1xf32>
    %149 = vector.broadcast %148 : vector<8x1xf32> to vector<8x8xf32>
    %150 = arith.mulf %145, %149 : vector<8x8xf32>
    %151 = arith.truncf %150 : vector<8x8xf32> to vector<8x8xbf16>
    %cst_44 = arith.constant dense<0.000000e+00> : vector<8x8xf32>
    %152 = tpu.matmul %151, %138, %cst_44 {dimension_numbers = #tpu.dot_dimension_numbers<[1], [0], [0], [1], [0, 0, 1, 1], [], []>} : vector<8x8xbf16>, vector<8x8xbf16>, vector<8x8xf32> -> vector<8x8xf32>
    %153 = tpu.concatenate %101, %118, %135, %152 in 1 : vector<8x8xf32>, vector<8x8xf32>, vector<8x8xf32>, vector<8x8xf32> -> vector<8x32xf32>
    %154 = tpu.concatenate %82, %153 in 0 : vector<8x32xf32>, vector<8x32xf32> -> vector<16x32xf32>
    %c0_45 = arith.constant 0 : index
    %c0_46 = arith.constant 0 : index
    %c0_47 = arith.constant 0 : index
    %155 = vector.load %arg10[%c0_45, %c0_46, %c0_47] : memref<1x6x32xf32, #tpu.memory_space<vmem>>, vector<1x6x32xf32>
    %156 = vector.shape_cast %155 : vector<1x6x32xf32> to vector<6x32xf32>
    %157 = vector.extract_strided_slice %156 {offsets = [0, 0], sizes = [1, 32], strides = [1, 1]} : vector<6x32xf32> to vector<1x32xf32>
    %158 = vector.extract_strided_slice %156 {offsets = [1, 0], sizes = [1, 32], strides = [1, 1]} : vector<6x32xf32> to vector<1x32xf32>
    %159 = vector.extract_strided_slice %156 {offsets = [2, 0], sizes = [1, 32], strides = [1, 1]} : vector<6x32xf32> to vector<1x32xf32>
    %160 = vector.extract_strided_slice %156 {offsets = [3, 0], sizes = [1, 32], strides = [1, 1]} : vector<6x32xf32> to vector<1x32xf32>
    %161 = vector.extract_strided_slice %156 {offsets = [4, 0], sizes = [1, 32], strides = [1, 1]} : vector<6x32xf32> to vector<1x32xf32>
    %162 = vector.extract_strided_slice %156 {offsets = [5, 0], sizes = [1, 32], strides = [1, 1]} : vector<6x32xf32> to vector<1x32xf32>
    %163 = arith.truncf %154 : vector<16x32xf32> to vector<16x32xbf16>
    %c0_48 = arith.constant 0 : index
    %c0_49 = arith.constant 0 : index
    %c0_50 = arith.constant 0 : index
    %164 = vector.load %arg6[%c0_48, %c0_49, %c0_50] : memref<1x32x32xbf16, #tpu.memory_space<vmem>>, vector<1x32x32xbf16>
    %165 = vector.shape_cast %164 : vector<1x32x32xbf16> to vector<32x32xbf16>
    %cst_51 = arith.constant dense<0.000000e+00> : vector<16x32xf32>
    %166 = tpu.matmul %163, %165, %cst_51 {dimension_numbers = #tpu.dot_dimension_numbers<[1], [0], [0], [1], [0, 0, 1, 1], [], []>} : vector<16x32xbf16>, vector<32x32xbf16>, vector<16x32xf32> -> vector<16x32xf32>
    %167 = vector.broadcast %157 : vector<1x32xf32> to vector<16x32xf32>
    %168 = arith.addf %166, %167 : vector<16x32xf32>
    %cst_52 = arith.constant dense<0.000000e+00> : vector<16xf32>
    %169 = vector.multi_reduction <add>, %168, %cst_52 [1] : vector<16x32xf32> to vector<16xf32>
    %170 = vector.shape_cast %169 : vector<16xf32> to vector<16x1xf32>
    %cst_53 = arith.constant 3.200000e+01 : f32
    %171 = vector.broadcast %cst_53 : f32 to vector<16x1xf32>
    %172 = arith.divf %170, %171 : vector<16x1xf32>
    %173 = vector.broadcast %172 : vector<16x1xf32> to vector<16x32xf32>
    %174 = arith.subf %168, %173 : vector<16x32xf32>
    %175 = arith.mulf %174, %174 : vector<16x32xf32>
    %cst_54 = arith.constant dense<0.000000e+00> : vector<16xf32>
    %176 = vector.multi_reduction <add>, %175, %cst_54 [1] : vector<16x32xf32> to vector<16xf32>
    %177 = vector.shape_cast %176 : vector<16xf32> to vector<16x1xf32>
    %cst_55 = arith.constant 3.200000e+01 : f32
    %178 = vector.broadcast %cst_55 : f32 to vector<16x1xf32>
    %179 = arith.divf %177, %178 : vector<16x1xf32>
    %180 = vector.broadcast %172 : vector<16x1xf32> to vector<16x32xf32>
    %181 = arith.subf %168, %180 : vector<16x32xf32>
    %cst_56 = arith.constant 9.99999974E-6 : f32
    %182 = vector.broadcast %cst_56 : f32 to vector<16x1xf32>
    %183 = arith.addf %179, %182 : vector<16x1xf32>
    %184 = math.rsqrt %183 : vector<16x1xf32>
    %185 = vector.broadcast %184 : vector<16x1xf32> to vector<16x32xf32>
    %186 = arith.mulf %181, %185 : vector<16x32xf32>
    %187 = vector.broadcast %158 : vector<1x32xf32> to vector<16x32xf32>
    %188 = arith.mulf %186, %187 : vector<16x32xf32>
    %189 = vector.broadcast %159 : vector<1x32xf32> to vector<16x32xf32>
    %190 = arith.addf %188, %189 : vector<16x32xf32>
    %c0_57 = arith.constant 0 : index
    %c0_58 = arith.constant 0 : index
    %191 = vector.load %arg13[%c0_57, %c0_58] : memref<16x32xf32, #tpu.memory_space<vmem>>, vector<16x32xf32>
    %192 = arith.addf %190, %191 : vector<16x32xf32>
    %193 = arith.truncf %192 : vector<16x32xf32> to vector<16x32xbf16>
    %c0_59 = arith.constant 0 : index
    %c0_60 = arith.constant 0 : index
    %c0_61 = arith.constant 0 : index
    %194 = vector.load %arg7[%c0_59, %c0_60, %c0_61] : memref<1x32x128xbf16, #tpu.memory_space<vmem>>, vector<1x32x128xbf16>
    %195 = vector.shape_cast %194 : vector<1x32x128xbf16> to vector<32x128xbf16>
    %cst_62 = arith.constant dense<0.000000e+00> : vector<16x128xf32>
    %196 = tpu.matmul %193, %195, %cst_62 {dimension_numbers = #tpu.dot_dimension_numbers<[1], [0], [0], [1], [0, 0, 1, 1], [], []>} : vector<16x32xbf16>, vector<32x128xbf16>, vector<16x128xf32> -> vector<16x128xf32>
    %c0_63 = arith.constant 0 : index
    %c0_64 = arith.constant 0 : index
    %c0_65 = arith.constant 0 : index
    %197 = vector.load %arg8[%c0_63, %c0_64, %c0_65] : memref<1x1x128xf32, #tpu.memory_space<vmem>>, vector<1x1x128xf32>
    %198 = vector.shape_cast %197 : vector<1x1x128xf32> to vector<1x128xf32>
    %199 = vector.broadcast %198 : vector<1x128xf32> to vector<16x128xf32>
    %200 = arith.addf %196, %199 : vector<16x128xf32>
    %cst_66 = arith.constant 0.000000e+00 : f32
    %201 = vector.broadcast %cst_66 : f32 to vector<16x128xf32>
    %202 = arith.maximumf %200, %201 : vector<16x128xf32>
    %203 = arith.truncf %202 : vector<16x128xf32> to vector<16x128xbf16>
    %c0_67 = arith.constant 0 : index
    %c0_68 = arith.constant 0 : index
    %c0_69 = arith.constant 0 : index
    %204 = vector.load %arg9[%c0_67, %c0_68, %c0_69] : memref<1x128x32xbf16, #tpu.memory_space<vmem>>, vector<1x128x32xbf16>
    %205 = vector.shape_cast %204 : vector<1x128x32xbf16> to vector<128x32xbf16>
    %cst_70 = arith.constant dense<0.000000e+00> : vector<16x32xf32>
    %206 = tpu.matmul %203, %205, %cst_70 {dimension_numbers = #tpu.dot_dimension_numbers<[1], [0], [0], [1], [0, 0, 1, 1], [], []>} : vector<16x128xbf16>, vector<128x32xbf16>, vector<16x32xf32> -> vector<16x32xf32>
    %207 = vector.broadcast %162 : vector<1x32xf32> to vector<16x32xf32>
    %208 = arith.addf %206, %207 : vector<16x32xf32>
    %cst_71 = arith.constant dense<0.000000e+00> : vector<16xf32>
    %209 = vector.multi_reduction <add>, %208, %cst_71 [1] : vector<16x32xf32> to vector<16xf32>
    %210 = vector.shape_cast %209 : vector<16xf32> to vector<16x1xf32>
    %cst_72 = arith.constant 3.200000e+01 : f32
    %211 = vector.broadcast %cst_72 : f32 to vector<16x1xf32>
    %212 = arith.divf %210, %211 : vector<16x1xf32>
    %213 = vector.broadcast %212 : vector<16x1xf32> to vector<16x32xf32>
    %214 = arith.subf %208, %213 : vector<16x32xf32>
    %215 = arith.mulf %214, %214 : vector<16x32xf32>
    %cst_73 = arith.constant dense<0.000000e+00> : vector<16xf32>
    %216 = vector.multi_reduction <add>, %215, %cst_73 [1] : vector<16x32xf32> to vector<16xf32>
    %217 = vector.shape_cast %216 : vector<16xf32> to vector<16x1xf32>
    %cst_74 = arith.constant 3.200000e+01 : f32
    %218 = vector.broadcast %cst_74 : f32 to vector<16x1xf32>
    %219 = arith.divf %217, %218 : vector<16x1xf32>
    %220 = vector.broadcast %212 : vector<16x1xf32> to vector<16x32xf32>
    %221 = arith.subf %208, %220 : vector<16x32xf32>
    %cst_75 = arith.constant 9.99999974E-6 : f32
    %222 = vector.broadcast %cst_75 : f32 to vector<16x1xf32>
    %223 = arith.addf %219, %222 : vector<16x1xf32>
    %224 = math.rsqrt %223 : vector<16x1xf32>
    %225 = vector.broadcast %224 : vector<16x1xf32> to vector<16x32xf32>
    %226 = arith.mulf %221, %225 : vector<16x32xf32>
    %227 = vector.broadcast %160 : vector<1x32xf32> to vector<16x32xf32>
    %228 = arith.mulf %226, %227 : vector<16x32xf32>
    %229 = vector.broadcast %161 : vector<1x32xf32> to vector<16x32xf32>
    %230 = arith.addf %228, %229 : vector<16x32xf32>
    %231 = arith.addf %230, %192 : vector<16x32xf32>
    %c0_76 = arith.constant 0 : index
    %c0_77 = arith.constant 0 : index
    %232 = vector.load %arg13[%c0_76, %c0_77] : memref<16x32xf32, #tpu.memory_space<vmem>>, vector<16x32xf32>
    tpu.vector_store %arg13[%c0_76, %c0_77], %231 {strides = array<i32>} : memref<16x32xf32, #tpu.memory_space<vmem>>, vector<16x32xf32>,
    %c1_i32 = arith.constant 1 : i32
    %233 = arith.cmpi eq, %arg1, %c1_i32 : i32
    %234 = arith.extui %233 : i1 to i32
    %c0_i32_78 = arith.constant 0 : i32
    %235 = arith.cmpi ne, %234, %c0_i32_78 : i32
    scf.if %235 {
      %c0_79 = arith.constant 0 : index
      %c0_80 = arith.constant 0 : index
      %236 = vector.load %arg11[%c0_79, %c0_80] : memref<2x32xf32, #tpu.memory_space<vmem>>, vector<2x32xf32>
      %237 = vector.extract_strided_slice %236 {offsets = [0, 0], sizes = [1, 32], strides = [1, 1]} : vector<2x32xf32> to vector<1x32xf32>
      %238 = vector.extract_strided_slice %236 {offsets = [1, 0], sizes = [1, 32], strides = [1, 1]} : vector<2x32xf32> to vector<1x32xf32>
      %cst_81 = arith.constant dense<0.000000e+00> : vector<16xf32>
      %239 = vector.multi_reduction <add>, %231, %cst_81 [1] : vector<16x32xf32> to vector<16xf32>
      %240 = vector.shape_cast %239 : vector<16xf32> to vector<16x1xf32>
      %cst_82 = arith.constant 3.200000e+01 : f32
      %241 = vector.broadcast %cst_82 : f32 to vector<16x1xf32>
      %242 = arith.divf %240, %241 : vector<16x1xf32>
      %243 = vector.broadcast %242 : vector<16x1xf32> to vector<16x32xf32>
      %244 = arith.subf %231, %243 : vector<16x32xf32>
      %245 = arith.mulf %244, %244 : vector<16x32xf32>
      %cst_83 = arith.constant dense<0.000000e+00> : vector<16xf32>
      %246 = vector.multi_reduction <add>, %245, %cst_83 [1] : vector<16x32xf32> to vector<16xf32>
      %247 = vector.shape_cast %246 : vector<16xf32> to vector<16x1xf32>
      %cst_84 = arith.constant 3.200000e+01 : f32
      %248 = vector.broadcast %cst_84 : f32 to vector<16x1xf32>
      %249 = arith.divf %247, %248 : vector<16x1xf32>
      %250 = vector.broadcast %242 : vector<16x1xf32> to vector<16x32xf32>
      %251 = arith.subf %231, %250 : vector<16x32xf32>
      %cst_85 = arith.constant 9.99999974E-6 : f32
      %252 = vector.broadcast %cst_85 : f32 to vector<16x1xf32>
      %253 = arith.addf %249, %252 : vector<16x1xf32>
      %254 = math.rsqrt %253 : vector<16x1xf32>
      %255 = vector.broadcast %254 : vector<16x1xf32> to vector<16x32xf32>
      %256 = arith.mulf %251, %255 : vector<16x32xf32>
      %257 = vector.broadcast %237 : vector<1x32xf32> to vector<16x32xf32>
      %258 = arith.mulf %256, %257 : vector<16x32xf32>
      %259 = vector.broadcast %238 : vector<1x32xf32> to vector<16x32xf32>
      %260 = arith.addf %258, %259 : vector<16x32xf32>
      %261 = vector.shape_cast %260 : vector<16x32xf32> to vector<2x8x32xf32>
      %c0_86 = arith.constant 0 : index
      %c0_87 = arith.constant 0 : index
      %c0_88 = arith.constant 0 : index
      %262 = vector.load %arg12[%c0_86, %c0_87, %c0_88] : memref<2x8x32xf32, #tpu.memory_space<vmem>>, vector<2x8x32xf32>
      tpu.vector_store %arg12[%c0_86, %c0_87, %c0_88], %261 {strides = array<i32>} : memref<2x8x32xf32, #tpu.memory_space<vmem>>, vector<2x8x32xf32>,
    } else {
    }
    return
  }
  func.func @transform_0(%arg0: i32, %arg1: i32) -> (i32, i32, i32) {
    %c0_i32 = arith.constant 0 : i32
    %c0_i32_0 = arith.constant 0 : i32
    %c0_i32_1 = arith.constant 0 : i32
    return %arg0, %c0_i32, %c0_i32_0 : i32, i32, i32
  }
  func.func @transform_1(%arg0: i32, %arg1: i32) -> (i32, i32, i32) {
    %c0_i32 = arith.constant 0 : i32
    %c0_i32_0 = arith.constant 0 : i32
    %c0_i32_1 = arith.constant 0 : i32
    return %arg0, %c0_i32, %c0_i32_0 : i32, i32, i32
  }
  func.func @transform_2(%arg0: i32, %arg1: i32) -> (i32, i32, i32) {
    %c0_i32 = arith.constant 0 : i32
    %c0_i32_0 = arith.constant 0 : i32
    %c0_i32_1 = arith.constant 0 : i32
    return %arg1, %c0_i32, %c0_i32_0 : i32, i32, i32
  }
  func.func @transform_3(%arg0: i32, %arg1: i32) -> (i32, i32, i32) {
    %c0_i32 = arith.constant 0 : i32
    %c0_i32_0 = arith.constant 0 : i32
    %c0_i32_1 = arith.constant 0 : i32
    return %arg1, %c0_i32, %c0_i32_0 : i32, i32, i32
  }
  func.func @transform_4(%arg0: i32, %arg1: i32) -> (i32, i32, i32) {
    %c0_i32 = arith.constant 0 : i32
    %c0_i32_0 = arith.constant 0 : i32
    %c0_i32_1 = arith.constant 0 : i32
    return %arg1, %c0_i32, %c0_i32_0 : i32, i32, i32
  }
  func.func @transform_5(%arg0: i32, %arg1: i32) -> (i32, i32, i32) {
    %c0_i32 = arith.constant 0 : i32
    %c0_i32_0 = arith.constant 0 : i32
    %c0_i32_1 = arith.constant 0 : i32
    return %arg1, %c0_i32, %c0_i32_0 : i32, i32, i32
  }
  func.func @transform_6(%arg0: i32, %arg1: i32) -> (i32, i32, i32) {
    %c0_i32 = arith.constant 0 : i32
    %c0_i32_0 = arith.constant 0 : i32
    %c0_i32_1 = arith.constant 0 : i32
    return %arg1, %c0_i32, %c0_i32_0 : i32, i32, i32
  }
  func.func @transform_7(%arg0: i32, %arg1: i32) -> (i32, i32, i32) {
    %c0_i32 = arith.constant 0 : i32
    %c0_i32_0 = arith.constant 0 : i32
    %c0_i32_1 = arith.constant 0 : i32
    return %arg1, %c0_i32, %c0_i32_0 : i32, i32, i32
  }
  func.func @transform_8(%arg0: i32, %arg1: i32) -> (i32, i32, i32) {
    %c0_i32 = arith.constant 0 : i32
    %c0_i32_0 = arith.constant 0 : i32
    %c0_i32_1 = arith.constant 0 : i32
    return %arg1, %c0_i32, %c0_i32_0 : i32, i32, i32
  }
  func.func @transform_9(%arg0: i32, %arg1: i32) -> (i32, i32) {
    %c0_i32 = arith.constant 0 : i32
    %c0_i32_0 = arith.constant 0 : i32
    %c0_i32_1 = arith.constant 0 : i32
    return %c0_i32, %c0_i32_0 : i32, i32
  }
  func.func @transform_10(%arg0: i32, %arg1: i32) -> (i32, i32, i32) {
    %c0_i32 = arith.constant 0 : i32
    %c0_i32_0 = arith.constant 0 : i32
    %c0_i32_1 = arith.constant 0 : i32
    return %arg0, %c0_i32, %c0_i32_0 : i32, i32, i32
  }
}

</mosaic_0001>

<llo_original>
// kernel: tpu_custom_call.1
$region0: #{tpu_custom_call.1}
  #allocation0 [shape = 'u32[]', space=smem, size = 0x4, offset = 0x4, fixed_abs, tag = 'smem constant byte address 0x4 - core index']
  #allocation1 [shape = 'u32[72,128]{1,0:T(1,128)}', space=vmem, size = 0x9000, scoped, tag = 'internal scratch']
  #allocation2 [shape = 'f32[16,32]{1,0:T(8,128)}', space=vmem, size = 0x2000, scoped, tag = 'scratch operand']
  #allocation3 [shape = 'f32[2,8,8]{2,1,0:T(8,128)}', space=vmem, size = 0x2000, scoped, tag = 'scratch operand']
  #allocation4 [shape = 'bf16[16,32]{1,0:T(8,128)(2,1)}', space=vmem, size = 0x1000, scoped, tag = 'scratch operand']
  %s0 = inlined_call_operand.vmem [shape: f32[2,8,32], index: 0, kind: input, shape index: {}]
  %s1 = inlined_call_operand.vmem [shape: s32[2,8,8], index: 1, kind: input, shape index: {}]
  %s2 = inlined_call_operand.vmem [shape: bf16[2,32,96], index: 2, kind: input, shape index: {}]
  %s3 = inlined_call_operand.vmem [shape: f32[2,1,96], index: 3, kind: input, shape index: {}]
  %s4 = inlined_call_operand.vmem [shape: bf16[2,32,32], index: 4, kind: input, shape index: {}]
  %s5 = inlined_call_operand.vmem [shape: bf16[2,32,128], index: 5, kind: input, shape index: {}]
  %s6 = inlined_call_operand.vmem [shape: f32[2,1,128], index: 6, kind: input, shape index: {}]
  %s7 = inlined_call_operand.vmem [shape: bf16[2,128,32], index: 7, kind: input, shape index: {}]
  %s8 = inlined_call_operand.vmem [shape: f32[2,6,32], index: 8, kind: input, shape index: {}]
  %s9 = inlined_call_operand.vmem [shape: f32[2,32], index: 9, kind: input, shape index: {}]
  %s10 = inlined_call_operand.hbm [shape: f32[2,8,32], index: 10, kind: output, shape index: {}]
  %s11 = sld [smem:[#allocation0]]
  $region81: #{tpu_custom_call.1} parent=0
    _
  %s13 = ssub.s32 1, %s11
  %s14 = scalar_select 0, %s13, %s11
  $region1: #{tpu_custom_call.1} parent=0
    #allocation5 [shape = 'u8[8192]{0}', space=vmem, size = 0x2000, scoped, tag = 'output window, operand 0, single buffered']
    #allocation6 [shape = 's32[2]{0}', space=sflag, size = 0x8, scoped, tag = 'scoped memory for tpu_custom_call.1']
    %15 = vsyncpa [#allocation6], 0
    loop: start=0, step=1, limit=4
    $region2: #{tpu_custom_call.1} parent=1 // loop_pre_header
      _
    $region3: #{tpu_custom_call.1} parent=1 // loop_header
      %s17 = sphi 0, %s21
      %p18 = scmp.ge.s32.totalorder %s17, 4
      %s24 = sphi 0, %s36
      %s25 = sphi 0, %s32
      %s26 = sphi 0, %s24
      %s27 = sphi 0, %s25
      %s28 = sphi 0, %s26
      %s29 = sphi 0, %s27
      %s39 = sphi 0, %s41
      %s42 = sphi 0, %s39
      %s43 = sphi 0, %s42
      %s59 = sphi 0, %s43
      %s65 = sphi 0, %s67
      %s68 = sphi 0, %s65
      %s69 = sphi 0, %s68
      %s85 = sphi 0, %s69
      %s91 = sphi 0, %s93
      %s94 = sphi 0, %s91
      %s95 = sphi 0, %s94
      %s111 = sphi 0, %s95
      %s117 = sphi 0, %s119
      %s120 = sphi 0, %s117
      %s121 = sphi 0, %s120
      %s137 = sphi 0, %s121
      %s143 = sphi 0, %s145
      %s146 = sphi 0, %s143
      %s147 = sphi 0, %s146
      %s163 = sphi 0, %s147
      %s169 = sphi 0, %s171
      %s172 = sphi 0, %s169
      %s173 = sphi 0, %s172
      %s189 = sphi 0, %s173
      %s195 = sphi 0, %s197
      %s198 = sphi 0, %s195
      %s199 = sphi 0, %s198
      %s215 = sphi 0, %s199
      %s221 = sphi 0, %s223
      %s224 = sphi 0, %s221
      %s225 = sphi 0, %s224
      %s241 = sphi 0, %s225
      %s247 = sphi 0, %s249
      %s250 = sphi 0, %s247
      %s251 = sphi 0, %s250
      %s267 = sphi 0, %s251
      %s271 = sphi 0, %s271
      %s273 = sphi 0, %s271
      %s274 = sphi 0, %s273
      %s288 = sphi 0, %s274
      %s294 = sphi 0, %s296
      %s297 = sphi 0, %s294
      %s298 = sphi 0, %s297
      %s314 = sphi 0, %s298
    $region4: #{tpu_custom_call.1} parent=1 // loop_header_branch
      %20 = sbr.rel (%p18) target = $region8
    $region5: #{tpu_custom_call.1} parent=1 // loop_body
      %s22 = ssub.s32 %s17, 1
      %s23 = ssub.s32 %s17, 2
      %s30 = sadd.s32 1, %s25
      %p31 = scmp.ge.s32.totalorder %s30, 2
      %s32 = scalar_select %p31, 0, %s30
      %s33 = sadd.s32 1, %s24
      %s34 = scalar_select %p31, %s33, %s24
      %p35 = scmp.ge.s32.totalorder %s34, 1
      %s36 = scalar_select %p35, 0, %s34
      %s37 = ssub.s32 %s24, %s36
      %p38 = scmp.eq.s32.totalorder %s37, 0
      %s40 = sadd.s32 %s39, 1
      %s41 = scalar_select %p38, %s39, %s40
      %p44 = pneg %p38
      %p45 = scmp.eq.s32.totalorder %s17, 1
      %p46 = por %p44, %p45
      %p47 = scmp.ne.s32.totalorder %s39, %s42
      %p48 = scmp.eq.s32.totalorder %s17, 0
      %p49 = por %p47, %p48
      %p50 = scmp.ne.s32.totalorder %s39, %s42
      %p51 = scmp.eq.s32.totalorder %s22, 1
      %p52 = por %p50, %p51
      %p53 = scmp.ne.s32.totalorder %s42, %s43
      %p54 = scmp.eq.s32.totalorder %s22, 0
      %p55 = por %p53, %p54
      %p56 = scmp.ne.s32.totalorder %s42, %s43
      %p57 = scmp.eq.s32.totalorder %s23, 1
      %p58 = por %p56, %p57
      %p60 = scmp.ne.s32.totalorder %s43, %s59
      %p61 = scmp.eq.s32.totalorder %s23, 0
      %p62 = por %p60, %p61
      %s63 = ssub.s32 %s24, %s36
      %p64 = scmp.eq.s32.totalorder %s63, 0
      %s66 = sadd.s32 %s65, 1
      %s67 = scalar_select %p64, %s65, %s66
      %p70 = pneg %p64
      %p71 = scmp.eq.s32.totalorder %s17, 1
      %p72 = por %p70, %p71
      %p73 = scmp.ne.s32.totalorder %s65, %s68
      %p74 = scmp.eq.s32.totalorder %s17, 0
      %p75 = por %p73, %p74
      %p76 = scmp.ne.s32.totalorder %s65, %s68
      %p77 = scmp.eq.s32.totalorder %s22, 1
      %p78 = por %p76, %p77
      %p79 = scmp.ne.s32.totalorder %s68, %s69
      %p80 = scmp.eq.s32.totalorder %s22, 0
      %p81 = por %p79, %p80
      %p82 = scmp.ne.s32.totalorder %s68, %s69
      %p83 = scmp.eq.s32.totalorder %s23, 1
      %p84 = por %p82, %p83
      %p86 = scmp.ne.s32.totalorder %s69, %s85
      %p87 = scmp.eq.s32.totalorder %s23, 0
      %p88 = por %p86, %p87
      %s89 = ssub.s32 %s25, %s32
      %p90 = scmp.eq.s32.totalorder %s89, 0
      %s92 = sadd.s32 %s91, 1
      %s93 = scalar_select %p90, %s91, %s92
      %p96 = pneg %p90
      %p97 = scmp.eq.s32.totalorder %s17, 1
      %p98 = por %p96, %p97
      %p99 = scmp.ne.s32.totalorder %s91, %s94
      %p100 = scmp.eq.s32.totalorder %s17, 0
      %p101 = por %p99, %p100
      %p102 = scmp.ne.s32.totalorder %s91, %s94
      %p103 = scmp.eq.s32.totalorder %s22, 1
      %p104 = por %p102, %p103
      %p105 = scmp.ne.s32.totalorder %s94, %s95
      %p106 = scmp.eq.s32.totalorder %s22, 0
      %p107 = por %p105, %p106
      %p108 = scmp.ne.s32.totalorder %s94, %s95
      %p109 = scmp.eq.s32.totalorder %s23, 1
      %p110 = por %p108, %p109
      %p112 = scmp.ne.s32.totalorder %s95, %s111
      %p113 = scmp.eq.s32.totalorder %s23, 0
      %p114 = por %p112, %p113
      %s115 = ssub.s32 %s25, %s32
      %p116 = scmp.eq.s32.totalorder %s115, 0
      %s118 = sadd.s32 %s117, 1
      %s119 = scalar_select %p116, %s117, %s118
      %p122 = pneg %p116
      %p123 = scmp.eq.s32.totalorder %s17, 1
      %p124 = por %p122, %p123
      %p125 = scmp.ne.s32.totalorder %s117, %s120
      %p126 = scmp.eq.s32.totalorder %s17, 0
      %p127 = por %p125, %p126
      %p128 = scmp.ne.s32.totalorder %s117, %s120
      %p129 = scmp.eq.s32.totalorder %s22, 1
      %p130 = por %p128, %p129
      %p131 = scmp.ne.s32.totalorder %s120, %s121
      %p132 = scmp.eq.s32.totalorder %s22, 0
      %p133 = por %p131, %p132
      %p134 = scmp.ne.s32.totalorder %s120, %s121
      %p135 = scmp.eq.s32.totalorder %s23, 1
      %p136 = por %p134, %p135
      %p138 = scmp.ne.s32.totalorder %s121, %s137
      %p139 = scmp.eq.s32.totalorder %s23, 0
      %p140 = por %p138, %p139
      %s141 = ssub.s32 %s25, %s32
      %p142 = scmp.eq.s32.totalorder %s141, 0
      %s144 = sadd.s32 %s143, 1
      %s145 = scalar_select %p142, %s143, %s144
      %p148 = pneg %p142
      %p149 = scmp.eq.s32.totalorder %s17, 1
      %p150 = por %p148, %p149
      %p151 = scmp.ne.s32.totalorder %s143, %s146
      %p152 = scmp.eq.s32.totalorder %s17, 0
      %p153 = por %p151, %p152
      %p154 = scmp.ne.s32.totalorder %s143, %s146
      %p155 = scmp.eq.s32.totalorder %s22, 1
      %p156 = por %p154, %p155
      %p157 = scmp.ne.s32.totalorder %s146, %s147
      %p158 = scmp.eq.s32.totalorder %s22, 0
      %p159 = por %p157, %p158
      %p160 = scmp.ne.s32.totalorder %s146, %s147
      %p161 = scmp.eq.s32.totalorder %s23, 1
      %p162 = por %p160, %p161
      %p164 = scmp.ne.s32.totalorder %s147, %s163
      %p165 = scmp.eq.s32.totalorder %s23, 0
      %p166 = por %p164, %p165
      %s167 = ssub.s32 %s25, %s32
      %p168 = scmp.eq.s32.totalorder %s167, 0
      %s170 = sadd.s32 %s169, 1
      %s171 = scalar_select %p168, %s169, %s170
      %p174 = pneg %p168
      %p175 = scmp.eq.s32.totalorder %s17, 1
      %p176 = por %p174, %p175
      %p177 = scmp.ne.s32.totalorder %s169, %s172
      %p178 = scmp.eq.s32.totalorder %s17, 0
      %p179 = por %p177, %p178
      %p180 = scmp.ne.s32.totalorder %s169, %s172
      %p181 = scmp.eq.s32.totalorder %s22, 1
      %p182 = por %p180, %p181
      %p183 = scmp.ne.s32.totalorder %s172, %s173
      %p184 = scmp.eq.s32.totalorder %s22, 0
      %p185 = por %p183, %p184
      %p186 = scmp.ne.s32.totalorder %s172, %s173
      %p187 = scmp.eq.s32.totalorder %s23, 1
      %p188 = por %p186, %p187
      %p190 = scmp.ne.s32.totalorder %s173, %s189
      %p191 = scmp.eq.s32.totalorder %s23, 0
      %p192 = por %p190, %p191
      %s193 = ssub.s32 %s25, %s32
      %p194 = scmp.eq.s32.totalorder %s193, 0
      %s196 = sadd.s32 %s195, 1
      %s197 = scalar_select %p194, %s195, %s196
      %p200 = pneg %p194
      %p201 = scmp.eq.s32.totalorder %s17, 1
      %p202 = por %p200, %p201
      %p203 = scmp.ne.s32.totalorder %s195, %s198
      %p204 = scmp.eq.s32.totalorder %s17, 0
      %p205 = por %p203, %p204
      %p206 = scmp.ne.s32.totalorder %s195, %s198
      %p207 = scmp.eq.s32.totalorder %s22, 1
      %p208 = por %p206, %p207
      %p209 = scmp.ne.s32.totalorder %s198, %s199
      %p210 = scmp.eq.s32.totalorder %s22, 0
      %p211 = por %p209, %p210
      %p212 = scmp.ne.s32.totalorder %s198, %s199
      %p213 = scmp.eq.s32.totalorder %s23, 1
      %p214 = por %p212, %p213
      %p216 = scmp.ne.s32.totalorder %s199, %s215
      %p217 = scmp.eq.s32.totalorder %s23, 0
      %p218 = por %p216, %p217
      %s219 = ssub.s32 %s25, %s32
      %p220 = scmp.eq.s32.totalorder %s219, 0
      %s222 = sadd.s32 %s221, 1
      %s223 = scalar_select %p220, %s221, %s222
      %p226 = pneg %p220
      %p227 = scmp.eq.s32.totalorder %s17, 1
      %p228 = por %p226, %p227
      %p229 = scmp.ne.s32.totalorder %s221, %s224
      %p230 = scmp.eq.s32.totalorder %s17, 0
      %p231 = por %p229, %p230
      %p232 = scmp.ne.s32.totalorder %s221, %s224
      %p233 = scmp.eq.s32.totalorder %s22, 1
      %p234 = por %p232, %p233
      %p235 = scmp.ne.s32.totalorder %s224, %s225
      %p236 = scmp.eq.s32.totalorder %s22, 0
      %p237 = por %p235, %p236
      %p238 = scmp.ne.s32.totalorder %s224, %s225
      %p239 = scmp.eq.s32.totalorder %s23, 1
      %p240 = por %p238, %p239
      %p242 = scmp.ne.s32.totalorder %s225, %s241
      %p243 = scmp.eq.s32.totalorder %s23, 0
      %p244 = por %p242, %p243
      %s245 = ssub.s32 %s25, %s32
      %p246 = scmp.eq.s32.totalorder %s245, 0
      %s248 = sadd.s32 %s247, 1
      %s249 = scalar_select %p246, %s247, %s248
      %p252 = pneg %p246
      %p253 = scmp.eq.s32.totalorder %s17, 1
      %p254 = por %p252, %p253
      %p255 = scmp.ne.s32.totalorder %s247, %s250
      %p256 = scmp.eq.s32.totalorder %s17, 0
      %p257 = por %p255, %p256
      %p258 = scmp.ne.s32.totalorder %s247, %s250
      %p259 = scmp.eq.s32.totalorder %s22, 1
      %p260 = por %p258, %p259
      %p261 = scmp.ne.s32.totalorder %s250, %s251
      %p262 = scmp.eq.s32.totalorder %s22, 0
      %p263 = por %p261, %p262
      %p264 = scmp.ne.s32.totalorder %s250, %s251
      %p265 = scmp.eq.s32.totalorder %s23, 1
      %p266 = por %p264, %p265
      %p268 = scmp.ne.s32.totalorder %s251, %s267
      %p269 = scmp.eq.s32.totalorder %s23, 0
      %p270 = por %p268, %p269
      %s272 = sadd.s32 %s271, 1
      %p275 = scmp.eq.s32.totalorder %s17, 1
      %p276 = scmp.ne.s32.totalorder %s271, %s273
      %p277 = scmp.eq.s32.totalorder %s17, 0
      %p278 = por %p276, %p277
      %p279 = scmp.ne.s32.totalorder %s271, %s273
      %p280 = scmp.eq.s32.totalorder %s22, 1
      %p281 = por %p279, %p280
      %p282 = scmp.ne.s32.totalorder %s273, %s274
      %p283 = scmp.eq.s32.totalorder %s22, 0
      %p284 = por %p282, %p283
      %p285 = scmp.ne.s32.totalorder %s273, %s274
      %p286 = scmp.eq.s32.totalorder %s23, 1
      %p287 = por %p285, %p286
      %p289 = scmp.ne.s32.totalorder %s274, %s288
      %p290 = scmp.eq.s32.totalorder %s23, 0
      %p291 = por %p289, %p290
      %s292 = ssub.s32 %s24, %s36
      %p293 = scmp.eq.s32.totalorder %s292, 0
      %s295 = sadd.s32 %s294, 1
      %s296 = scalar_select %p293, %s294, %s295
      %p299 = pneg %p293
      %p300 = scmp.eq.s32.totalorder %s17, 1
      %p301 = por %p299, %p300
      %p302 = scmp.ne.s32.totalorder %s294, %s297
      %p303 = scmp.eq.s32.totalorder %s17, 0
      %p304 = por %p302, %p303
      %p305 = scmp.ne.s32.totalorder %s294, %s297
      %p306 = scmp.eq.s32.totalorder %s22, 1
      %p307 = por %p305, %p306
      %p308 = scmp.ne.s32.totalorder %s297, %s298
      %p309 = scmp.eq.s32.totalorder %s22, 0
      %p310 = por %p308, %p309
      %p311 = scmp.ne.s32.totalorder %s297, %s298
      %p312 = scmp.eq.s32.totalorder %s23, 1
      %p313 = por %p311, %p312
      %p315 = scmp.ne.s32.totalorder %s298, %s314
      %p316 = scmp.eq.s32.totalorder %s23, 0
      %p317 = por %p315, %p316
      %p318 = scmp.le.s32.totalorder 1, %s17
      %p319 = scmp.lt.s32.totalorder %s17, 3
      %p320 = pnand %p318, %p319
      %p321 = pneg %p320
      // Predicated region
      $region9: #{tpu_custom_call.1} parent=5 // pred_check
        _
      $region10: #{tpu_custom_call.1} parent=5 // pred_check_branch
        %323 = sbr.rel (%p320) target = $region12
      $region11: #{tpu_custom_call.1} parent=5 // pred_region
        %s324 = ssub.s32 %s17, 1
        // Predicated region
        $region13: #{tpu_custom_call.1} parent=11 // pred_check
          %p325 = pneg %p55
        $region14: #{tpu_custom_call.1} parent=11 // pred_check_branch
          %327 = sbr.rel (%p325) target = $region16
        $region15: #{tpu_custom_call.1} parent=11 // pred_region
          %s328 = smul.u32 2, %s26
          %p329 = scmp.lt.s32.totalorder %s328, 1
          %s330 = scalar_select %p329, %s328, 1
          %s331 = smul.addr %s330, 8
          %s332 = scalar_lea.vmem %s0, %s331
          %s333 = smul.u32 2, %s26
        $region16: #{tpu_custom_call.1} parent=11 // pred_fallthru
          _
        // Predicated region
        $region17: #{tpu_custom_call.1} parent=11 // pred_check
          %p334 = pneg %p81
        $region18: #{tpu_custom_call.1} parent=11 // pred_check_branch
          %336 = sbr.rel (%p334) target = $region20
        $region19: #{tpu_custom_call.1} parent=11 // pred_region
          %s337 = smul.u32 2, %s26
          %p338 = scmp.lt.s32.totalorder %s337, 1
          %s339 = scalar_select %p338, %s337, 1
          %s340 = smul.addr %s339, 8
          %s341 = scalar_lea.vmem %s1, %s340
          %s342 = smul.u32 2, %s26
        $region20: #{tpu_custom_call.1} parent=11 // pred_fallthru
          _
        // Predicated region
        $region21: #{tpu_custom_call.1} parent=11 // pred_check
          %p343 = pneg %p284
        $region22: #{tpu_custom_call.1} parent=11 // pred_check_branch
          %345 = sbr.rel (%p343) target = $region24
        $region23: #{tpu_custom_call.1} parent=11 // pred_region
          _
        $region24: #{tpu_custom_call.1} parent=11 // pred_fallthru
          _
      $region12: #{tpu_custom_call.1} parent=5 // pred_fallthru
        _
      %p346 = scmp.lt.s32.totalorder %s17, 2
      // Predicated region
      $region25: #{tpu_custom_call.1} parent=5 // pred_check
        %p347 = pneg %p346
      $region26: #{tpu_custom_call.1} parent=5 // pred_check_branch
        %349 = sbr.rel (%p347) target = $region28
      $region27: #{tpu_custom_call.1} parent=5 // pred_region
        // Predicated region
        $region29: #{tpu_custom_call.1} parent=27 // pred_check
          %p350 = pneg %p101
        $region30: #{tpu_custom_call.1} parent=27 // pred_check_branch
          %352 = sbr.rel (%p350) target = $region32
        $region31: #{tpu_custom_call.1} parent=27 // pred_region
          %p353 = scmp.lt.s32.totalorder %s25, 1
          %s354 = scalar_select %p353, %s25, 1
          %s355 = smul.addr %s354, 4
          %s356 = smul.addr %s355, 4
          %s357 = scalar_lea.vmem %s2, %s356
        $region32: #{tpu_custom_call.1} parent=27 // pred_fallthru
          _
        // Predicated region
        $region33: #{tpu_custom_call.1} parent=27 // pred_check
          %p358 = pneg %p127
        $region34: #{tpu_custom_call.1} parent=27 // pred_check_branch
          %360 = sbr.rel (%p358) target = $region36
        $region35: #{tpu_custom_call.1} parent=27 // pred_region
          %p361 = scmp.lt.s32.totalorder %s25, 1
          %s362 = scalar_select %p361, %s25, 1
          %s363 = scalar_lea.vmem %s3, %s362
        $region36: #{tpu_custom_call.1} parent=27 // pred_fallthru
          _
        // Predicated region
        $region37: #{tpu_custom_call.1} parent=27 // pred_check
          %p364 = pneg %p153
        $region38: #{tpu_custom_call.1} parent=27 // pred_check_branch
          %366 = sbr.rel (%p364) target = $region40
        $region39: #{tpu_custom_call.1} parent=27 // pred_region
          %p367 = scmp.lt.s32.totalorder %s25, 1
          %s368 = scalar_select %p367, %s25, 1
          %s369 = smul.addr %s368, 4
          %s370 = smul.addr %s369, 4
          %s371 = scalar_lea.vmem %s4, %s370
        $region40: #{tpu_custom_call.1} parent=27 // pred_fallthru
          _
        // Predicated region
        $region41: #{tpu_custom_call.1} parent=27 // pred_check
          %p372 = pneg %p179
        $region42: #{tpu_custom_call.1} parent=27 // pred_check_branch
          %374 = sbr.rel (%p372) target = $region44
        $region43: #{tpu_custom_call.1} parent=27 // pred_region
          %p375 = scmp.lt.s32.totalorder %s25, 1
          %s376 = scalar_select %p375, %s25, 1
          %s377 = smul.addr %s376, 4
          %s378 = smul.addr %s377, 4
          %s379 = scalar_lea.vmem %s5, %s378
        $region44: #{tpu_custom_call.1} parent=27 // pred_fallthru
          _
        // Predicated region
        $region45: #{tpu_custom_call.1} parent=27 // pred_check
          %p380 = pneg %p205
        $region46: #{tpu_custom_call.1} parent=27 // pred_check_branch
          %382 = sbr.rel (%p380) target = $region48
        $region47: #{tpu_custom_call.1} parent=27 // pred_region
          %p383 = scmp.lt.s32.totalorder %s25, 1
          %s384 = scalar_select %p383, %s25, 1
          %s385 = scalar_lea.vmem %s6, %s384
        $region48: #{tpu_custom_call.1} parent=27 // pred_fallthru
          _
        // Predicated region
        $region49: #{tpu_custom_call.1} parent=27 // pred_check
          %p386 = pneg %p231
        $region50: #{tpu_custom_call.1} parent=27 // pred_check_branch
          %388 = sbr.rel (%p386) target = $region52
        $region51: #{tpu_custom_call.1} parent=27 // pred_region
          %p389 = scmp.lt.s32.totalorder %s25, 1
          %s390 = scalar_select %p389, %s25, 1
          %s391 = smul.addr %s390, 16
          %s392 = smul.addr %s391, 4
          %s393 = scalar_lea.vmem %s7, %s392
        $region52: #{tpu_custom_call.1} parent=27 // pred_fallthru
          _
        // Predicated region
        $region53: #{tpu_custom_call.1} parent=27 // pred_check
          %p394 = pneg %p257
        $region54: #{tpu_custom_call.1} parent=27 // pred_check_branch
          %396 = sbr.rel (%p394) target = $region56
        $region55: #{tpu_custom_call.1} parent=27 // pred_region
          %p397 = scmp.lt.s32.totalorder %s25, 1
          %s398 = scalar_select %p397, %s25, 1
          %s399 = smul.addr %s398, 8
          %s400 = scalar_lea.vmem %s8, %s399
        $region56: #{tpu_custom_call.1} parent=27 // pred_fallthru
          _
      $region28: #{tpu_custom_call.1} parent=5 // pred_fallthru
        _
      %p401 = scmp.le.s32.totalorder 1, %s17
      %p402 = scmp.lt.s32.totalorder %s17, 3
      %p403 = pnand %p401, %p402
      %p404 = pneg %p403
      // Predicated region
      $region57: #{tpu_custom_call.1} parent=5 // pred_check
        _
      $region58: #{tpu_custom_call.1} parent=5 // pred_check_branch
        %406 = sbr.rel (%p403) target = $region60
      $region59: #{tpu_custom_call.1} parent=5 // pred_region
        %s407 = ssub.s32 %s17, 1
        %s408 = smul.u32 2, %s26
        %p409 = scmp.lt.s32.totalorder %s408, 1
        %s410 = scalar_select %p409, %s408, 1
        %s411 = smul.addr %s410, 8
        %s412 = scalar_lea.vmem %s0, %s411
        %p413 = pneg %p55
        %p414 = pneg %p52
        %s415 = smul.u32 2, %s26
        %p416 = scmp.lt.s32.totalorder %s415, 1
        %s417 = scalar_select %p416, %s415, 1
        %s418 = smul.addr %s417, 8
        %s419 = scalar_lea.vmem %s1, %s418
        %p420 = pneg %p81
        %p421 = pneg %p78
        %p422 = scmp.lt.s32.totalorder %s27, 1
        %s423 = scalar_select %p422, %s27, 1
        %s424 = smul.addr %s423, 4
        %s425 = smul.addr %s424, 4
        %s426 = scalar_lea.vmem %s2, %s425
        %p427 = pneg %p107
        %p428 = pneg %p104
        %p429 = scmp.lt.s32.totalorder %s27, 1
        %s430 = scalar_select %p429, %s27, 1
        %s431 = scalar_lea.vmem %s3, %s430
        %p432 = pneg %p133
        %p433 = pneg %p130
        %p434 = scmp.lt.s32.totalorder %s27, 1
        %s435 = scalar_select %p434, %s27, 1
        %s436 = smul.addr %s435, 4
        %s437 = smul.addr %s436, 4
        %s438 = scalar_lea.vmem %s4, %s437
        %p439 = pneg %p159
        %p440 = pneg %p156
        %p441 = scmp.lt.s32.totalorder %s27, 1
        %s442 = scalar_select %p441, %s27, 1
        %s443 = smul.addr %s442, 4
        %s444 = smul.addr %s443, 4
        %s445 = scalar_lea.vmem %s5, %s444
        %p446 = pneg %p185
        %p447 = pneg %p182
        %p448 = scmp.lt.s32.totalorder %s27, 1
        %s449 = scalar_select %p448, %s27, 1
        %s450 = scalar_lea.vmem %s6, %s449
        %p451 = pneg %p211
        %p452 = pneg %p208
        %p453 = scmp.lt.s32.totalorder %s27, 1
        %s454 = scalar_select %p453, %s27, 1
        %s455 = smul.addr %s454, 16
        %s456 = smul.addr %s455, 4
        %s457 = scalar_lea.vmem %s7, %s456
        %p458 = pneg %p237
        %p459 = pneg %p234
        %p460 = scmp.lt.s32.totalorder %s27, 1
        %s461 = scalar_select %p460, %s27, 1
        %s462 = smul.addr %s461, 8
        %s463 = scalar_lea.vmem %s8, %s462
        %p464 = pneg %p263
        %p465 = pneg %p260
        %p466 = pneg %p284
        %p467 = pneg %p281
        %p468 = pneg %p310
        %p469 = pneg %p307
        %s470 = smul.u32 2, %s26
        %p471 = scmp.lt.s32.totalorder %s470, 1
        %s472 = scalar_select %p471, %s470, 1
        %s473 = smul.addr %s472, 8
        %s474 = scalar_lea.vmem %s0, %s473
        %s475 = smul.u32 2, %s26
        %s476 = smul.u32 2, %s26
        %p477 = scmp.lt.s32.totalorder %s476, 1
        %s478 = scalar_select %p477, %s476, 1
        %s479 = smul.addr %s478, 8
        %s480 = scalar_lea.vmem %s1, %s479
        %s481 = smul.u32 2, %s26
        %p482 = scmp.lt.s32.totalorder %s27, 1
        %s483 = scalar_select %p482, %s27, 1
        %s484 = smul.addr %s483, 4
        %s485 = smul.addr %s484, 4
        %s486 = scalar_lea.vmem %s2, %s485
        %p487 = scmp.lt.s32.totalorder %s27, 1
        %s488 = scalar_select %p487, %s27, 1
        %s489 = scalar_lea.vmem %s3, %s488
        %p490 = scmp.lt.s32.totalorder %s27, 1
        %s491 = scalar_select %p490, %s27, 1
        %s492 = smul.addr %s491, 4
        %s493 = smul.addr %s492, 4
        %s494 = scalar_lea.vmem %s4, %s493
        %p495 = scmp.lt.s32.totalorder %s27, 1
        %s496 = scalar_select %p495, %s27, 1
        %s497 = smul.addr %s496, 4
        %s498 = smul.addr %s497, 4
        %s499 = scalar_lea.vmem %s5, %s498
        %p500 = scmp.lt.s32.totalorder %s27, 1
        %s501 = scalar_select %p500, %s27, 1
        %s502 = scalar_lea.vmem %s6, %s501
        %p503 = scmp.lt.s32.totalorder %s27, 1
        %s504 = scalar_select %p503, %s27, 1
        %s505 = smul.addr %s504, 16
        %s506 = smul.addr %s505, 4
        %s507 = scalar_lea.vmem %s7, %s506
        %p508 = scmp.lt.s32.totalorder %s27, 1
        %s509 = scalar_select %p508, %s27, 1
        %s510 = smul.addr %s509, 8
        %s511 = scalar_lea.vmem %s8, %s510
        %s512 = smul.u32 2, %s26
        %p514 = scmp.eq.s32.totalorder %s27, 0
        // Predicated region
        $region61: #{tpu_custom_call.1} parent=59 // pred_check
          %p515 = pneg %p514
        $region62: #{tpu_custom_call.1} parent=59 // pred_check_branch
          %517 = sbr.rel (%p515) target = $region64
        $region63: #{tpu_custom_call.1} parent=59 // pred_region
          %v518 = vld [vmem:[%s474] sm:$0xff]
          %v519 = vld [vmem:[%s474 + $0x8] sm:$0xff]
          %vm520 = vcmask 261120
          %521 = vst.msk [vmem:[#allocation2] sm:$0xff] %vm520, %v518
          %522 = vst.msk [vmem:[#allocation2 + $0x8] sm:$0xff] %vm520, %v519
          %v523 = vpack.c.bf16 %v518, %v518
          %v524 = vpack.c.bf16 %v519, %v519
          %vm525 = vcmask 257024
          %526 = vst.msk [vmem:[#allocation4] sm:$0xf] %vm525, %v523
          %527 = vst.msk [vmem:[#allocation4 + $0x4] sm:$0xf] %vm525, %v524
          %v528 = vld [vmem:[%s480] sm:$0xff]
          %v529 = vld [vmem:[%s480 + $0x8] sm:$0xff]
          %vm530 = vcmp.eq.s32.totalorder %v528, 0
          %vm531 = vcmp.eq.s32.totalorder %v529, 0
          %v532 = vsel %vm530, -1e+09, 0.0
          %v533 = vsel %vm531, -1e+09, 0.0
          %vm534 = vcmask 64512
          %535 = vst.msk [vmem:[#allocation3] sm:$0xff] %vm534, %v532
          %536 = vst.msk [vmem:[#allocation3 + $0x8] sm:$0xff] %vm534, %v533
        $region64: #{tpu_custom_call.1} parent=59 // pred_fallthru
          _
        %v537 = vld [vmem:[#allocation4] sm:$0xf]
        %v538 = vld [vmem:[#allocation4 + $0x4] sm:$0xf]
        %v539 = vld [vmem:[%s486] sm:$0xf]
        %v540 = vld [vmem:[%s486 + $0x4] sm:$0xf]
        %v541 = vld [vmem:[%s486 + $0x8] sm:$0xf]
        %v542 = vld [vmem:[%s486 + $0xc] sm:$0xf]
        %v543 = vld [vmem:[%s489] sm:$0x1]
        %v545 = vperm.slane %v543, 0
        %v549 = vunpack.c.l.b16 %v537
        %v550 = vunpack.c.l.b16 %v538
        %v551 = vpack.c.b16 %v550, %v549
        %v556 = vunpack.c.l.b16 %v539
        %v557 = vunpack.c.l.b16 %v540
        %v558 = vunpack.c.l.b16 %v541
        %v559 = vunpack.c.l.b16 %v542
        %v560 = vpack.c.b16 %v557, %v556
        %v561 = vpack.c.b16 %v559, %v558
        %vm564 = vcmask 261120
        %v566 = vsel %vm564, %v551, 0
        %568 = vmatpush.bf16.msra.mxu0 0
        %569 = vmatpush.bf16.msra.mxu0 0
        %570 = vmatpush.bf16.msra.mxu0 0
        %571 = vmatpush.bf16.msra.mxu0 0
        %572 = vmatpush.bf16.msra.mxu0 0
        %573 = vmatpush.bf16.msra.mxu0 0
        %574 = vmatpush.bf16.msra.mxu0 %v561
        %575 = vmatpush.bf16.msra.mxu0 %v560
        %576 = vmatmul.bf16.gmra.mxu0 %v566
        %v577 = vpop.f32.mrf.mxu0
        %v578 = vadd.f32 %v545, %v577
        %v579 = vpop.f32.mrf.mxu0
        %v580 = vadd.f32 %v545, %v579
        %581 = vdwg.mxu0
        %v582 = vpack.c.bf16 %v578, %v578
        %v583 = vpack.c.bf16 %v580, %v580
        %v584 = vld [vmem:[#allocation3] sm:$0xff]
        %v586 = vunpack.c.l.b16 %v582
        %v587 = vpack.c.b16 %v586, %v586
        %588 = vrot.lane.b32.xlu0 %v587, 96
        %v589 = vpop.permute.xlu0 %588
        %vm590 = vcmask 64512
        %v592 = vsel %vm590, %v582, 0
        %v595 = vsel %vm590, %v589, 0
        %597 = vmatpush.bf16.xpose.msra.mxu0 0
        %598 = vmatpush.bf16.xpose.msra.mxu0 0
        %599 = vmatpush.bf16.xpose.msra.mxu0 0
        %600 = vmatpush.bf16.xpose.msra.mxu0 0
        %601 = vmatpush.bf16.xpose.msra.mxu0 0
        %602 = vmatpush.bf16.xpose.msra.mxu0 0
        %603 = vmatpush.bf16.xpose.msra.mxu0 0
        %604 = vmatpush.bf16.xpose.msra.mxu0 %v595
        %605 = vmatmul.bf16.gmra.mxu0 %v592
        %v606 = vpop.f32.mrf.mxu0
        %v607 = vadd.f32 %v584, %v606
        %v608 = vpop.f32.mrf.mxu0
        %609 = vdwg.mxu0
        %v610 = vsel %vm590, %v607, -inf
        %611 = vmax.xlane.f32.xlu0 %v610
        %v612 = vpop.xlane.xlu0 %611
        %v613 = vsub.f32 %v607, %v612
        %v614 = vmul.f32 %v613, 1.442695
        %v615 = vpow.pop %v614
        %v616 = vsel %vm590, %v615, 0.0
        %617 = vadd.xlane.f32.xlu0 %v616
        %v618 = vpop.xlane.xlu0 %617
        %v619 = vrcp.pop %v618
        %v620 = vmul.f32 %v615, %v619
        %v621 = vpack.c.bf16 %v620, %v620
        %622 = vrot.lane.b32.xlu0 %v587, 64
        %v623 = vpop.permute.xlu0 %622
        %v625 = vsel %vm590, %v621, 0
        %vm627 = vcmask 1043456
        %v629 = vsel %vm627, %v623, 0
        %631 = vmatpush.bf16.msra.mxu0 0
        %632 = vmatpush.bf16.msra.mxu0 0
        %633 = vmatpush.bf16.msra.mxu0 0
        %634 = vmatpush.bf16.msra.mxu0 0
        %635 = vmatpush.bf16.msra.mxu0 0
        %636 = vmatpush.bf16.msra.mxu0 0
        %637 = vmatpush.bf16.msra.mxu0 0
        %638 = vmatpush.bf16.msra.mxu0 %v629
        %639 = vmatmul.bf16.gmra.mxu0 %v625
        %v640 = vpop.f32.mrf.mxu0
        %v641 = vadd.f32 0.0, %v640
        %v642 = vpop.f32.mrf.mxu0
        %643 = vdwg.mxu0
        %644 = vrot.lane.b32.xlu0 %v587, 120
        %v645 = vpop.permute.xlu0 %644
        %646 = vrot.lane.b32.xlu0 %v587, 88
        %v647 = vpop.permute.xlu0 %646
        %v649 = vsel %vm590, %v645, 0
        %v652 = vsel %vm590, %v647, 0
        %654 = vmatpush.bf16.xpose.msra.mxu0 0
        %655 = vmatpush.bf16.xpose.msra.mxu0 0
        %656 = vmatpush.bf16.xpose.msra.mxu0 0
        %657 = vmatpush.bf16.xpose.msra.mxu0 0
        %658 = vmatpush.bf16.xpose.msra.mxu0 0
        %659 = vmatpush.bf16.xpose.msra.mxu0 0
        %660 = vmatpush.bf16.xpose.msra.mxu0 0
        %661 = vmatpush.bf16.xpose.msra.mxu0 %v652
        %662 = vmatmul.bf16.gmra.mxu0 %v649
        %v663 = vpop.f32.mrf.mxu0
        %v664 = vadd.f32 %v584, %v663
        %v665 = vpop.f32.mrf.mxu0
        %666 = vdwg.mxu0
        %v667 = vsel %vm590, %v664, -inf
        %668 = vmax.xlane.f32.xlu0 %v667
        %v669 = vpop.xlane.xlu0 %668
        %v670 = vsub.f32 %v664, %v669
        %v671 = vmul.f32 %v670, 1.442695
        %v672 = vpow.pop %v671
        %v673 = vsel %vm590, %v672, 0.0
        %674 = vadd.xlane.f32.xlu0 %v673
        %v675 = vpop.xlane.xlu0 %674
        %v676 = vrcp.pop %v675
        %v677 = vmul.f32 %v672, %v676
        %v678 = vpack.c.bf16 %v677, %v677
        %679 = vrot.lane.b32.xlu0 %v587, 56
        %v680 = vpop.permute.xlu0 %679
        %v682 = vsel %vm590, %v678, 0
        %v685 = vsel %vm627, %v680, 0
        %687 = vmatpush.bf16.msra.mxu0 0
        %688 = vmatpush.bf16.msra.mxu0 0
        %689 = vmatpush.bf16.msra.mxu0 0
        %690 = vmatpush.bf16.msra.mxu0 0
        %691 = vmatpush.bf16.msra.mxu0 0
        %692 = vmatpush.bf16.msra.mxu0 0
        %693 = vmatpush.bf16.msra.mxu0 0
        %694 = vmatpush.bf16.msra.mxu0 %v685
        %695 = vmatmul.bf16.gmra.mxu0 %v682
        %v696 = vpop.f32.mrf.mxu0
        %v697 = vadd.f32 0.0, %v696
        %v698 = vpop.f32.mrf.mxu0
        %699 = vdwg.mxu0
        %700 = vrot.lane.b32.xlu0 %v587, 112
        %v701 = vpop.permute.xlu0 %700
        %702 = vrot.lane.b32.xlu0 %v587, 80
        %v703 = vpop.permute.xlu0 %702
        %v705 = vsel %vm590, %v701, 0
        %v708 = vsel %vm590, %v703, 0
        %710 = vmatpush.bf16.xpose.msra.mxu0 0
        %711 = vmatpush.bf16.xpose.msra.mxu0 0
        %712 = vmatpush.bf16.xpose.msra.mxu0 0
        %713 = vmatpush.bf16.xpose.msra.mxu0 0
        %714 = vmatpush.bf16.xpose.msra.mxu0 0
        %715 = vmatpush.bf16.xpose.msra.mxu0 0
        %716 = vmatpush.bf16.xpose.msra.mxu0 0
        %717 = vmatpush.bf16.xpose.msra.mxu0 %v708
        %718 = vmatmul.bf16.gmra.mxu0 %v705
        %v719 = vpop.f32.mrf.mxu0
        %v720 = vadd.f32 %v584, %v719
        %v721 = vpop.f32.mrf.mxu0
        %722 = vdwg.mxu0
        %v723 = vsel %vm590, %v720, -inf
        %724 = vmax.xlane.f32.xlu0 %v723
        %v725 = vpop.xlane.xlu0 %724
        %v726 = vsub.f32 %v720, %v725
        %v727 = vmul.f32 %v726, 1.442695
        %v728 = vpow.pop %v727
        %v729 = vsel %vm590, %v728, 0.0
        %730 = vadd.xlane.f32.xlu0 %v729
        %v731 = vpop.xlane.xlu0 %730
        %v732 = vrcp.pop %v731
        %v733 = vmul.f32 %v728, %v732
        %v734 = vpack.c.bf16 %v733, %v733
        %735 = vrot.lane.b32.xlu0 %v587, 48
        %v736 = vpop.permute.xlu0 %735
        %v738 = vsel %vm590, %v734, 0
        %v741 = vsel %vm627, %v736, 0
        %743 = vmatpush.bf16.msra.mxu0 0
        %744 = vmatpush.bf16.msra.mxu0 0
        %745 = vmatpush.bf16.msra.mxu0 0
        %746 = vmatpush.bf16.msra.mxu0 0
        %747 = vmatpush.bf16.msra.mxu0 0
        %748 = vmatpush.bf16.msra.mxu0 0
        %749 = vmatpush.bf16.msra.mxu0 0
        %750 = vmatpush.bf16.msra.mxu0 %v741
        %751 = vmatmul.bf16.gmra.mxu0 %v738
        %v752 = vpop.f32.mrf.mxu0
        %v753 = vadd.f32 0.0, %v752
        %v754 = vpop.f32.mrf.mxu0
        %755 = vdwg.mxu0
        %756 = vrot.lane.b32.xlu0 %v587, 104
        %v757 = vpop.permute.xlu0 %756
        %758 = vrot.lane.b32.xlu0 %v587, 72
        %v759 = vpop.permute.xlu0 %758
        %v761 = vsel %vm590, %v757, 0
        %v764 = vsel %vm590, %v759, 0
        %766 = vmatpush.bf16.xpose.msra.mxu0 0
        %767 = vmatpush.bf16.xpose.msra.mxu0 0
        %768 = vmatpush.bf16.xpose.msra.mxu0 0
        %769 = vmatpush.bf16.xpose.msra.mxu0 0
        %770 = vmatpush.bf16.xpose.msra.mxu0 0
        %771 = vmatpush.bf16.xpose.msra.mxu0 0
        %772 = vmatpush.bf16.xpose.msra.mxu0 0
        %773 = vmatpush.bf16.xpose.msra.mxu0 %v764
        %774 = vmatmul.bf16.gmra.mxu0 %v761
        %v775 = vpop.f32.mrf.mxu0
        %v776 = vadd.f32 %v584, %v775
        %v777 = vpop.f32.mrf.mxu0
        %778 = vdwg.mxu0
        %v779 = vsel %vm590, %v776, -inf
        %780 = vmax.xlane.f32.xlu0 %v779
        %v781 = vpop.xlane.xlu0 %780
        %v782 = vsub.f32 %v776, %v781
        %v783 = vmul.f32 %v782, 1.442695
        %v784 = vpow.pop %v783
        %v785 = vsel %vm590, %v784, 0.0
        %786 = vadd.xlane.f32.xlu0 %v785
        %v787 = vpop.xlane.xlu0 %786
        %v788 = vrcp.pop %v787
        %v789 = vmul.f32 %v784, %v788
        %v790 = vpack.c.bf16 %v789, %v789
        %791 = vrot.lane.b32.xlu0 %v587, 40
        %v792 = vpop.permute.xlu0 %791
        %v794 = vsel %vm590, %v790, 0
        %v797 = vsel %vm627, %v792, 0
        %799 = vmatpush.bf16.msra.mxu0 0
        %800 = vmatpush.bf16.msra.mxu0 0
        %801 = vmatpush.bf16.msra.mxu0 0
        %802 = vmatpush.bf16.msra.mxu0 0
        %803 = vmatpush.bf16.msra.mxu0 0
        %804 = vmatpush.bf16.msra.mxu0 0
        %805 = vmatpush.bf16.msra.mxu0 0
        %806 = vmatpush.bf16.msra.mxu0 %v797
        %807 = vmatmul.bf16.gmra.mxu0 %v794
        %v808 = vpop.f32.mrf.mxu0
        %v809 = vadd.f32 0.0, %v808
        %v810 = vpop.f32.mrf.mxu0
        %811 = vdwg.mxu0
        %813 = vrot.lane.b32.xlu0 %v697, 8
        %v814 = vpop.permute.xlu0 %813
        %817 = vrot.lane.b32.xlu0 %v753, 16
        %v818 = vpop.permute.xlu0 %817
        %821 = vrot.lane.b32.xlu0 %v809, 24
        %v822 = vpop.permute.xlu0 %821
        %v824 = vsel %vm590, %v641, %v814
        %vm825 = vcmask 130048
        %v826 = vsel %vm825, %v824, %v818
        %vm827 = vcmask 195584
        %v828 = vsel %vm827, %v826, %v822
        %s829 = scalar_lea.vmem [#allocation3], 8
        %v830 = vld [vmem:[%s829] sm:$0xff]
        %v832 = vunpack.c.l.b16 %v583
        %v833 = vpack.c.b16 %v832, %v832
        %834 = vrot.lane.b32.xlu0 %v833, 96
        %v835 = vpop.permute.xlu0 %834
        %v837 = vsel %vm590, %v583, 0
        %v840 = vsel %vm590, %v835, 0
        %842 = vmatpush.bf16.xpose.msra.mxu0 0
        %843 = vmatpush.bf16.xpose.msra.mxu0 0
        %844 = vmatpush.bf16.xpose.msra.mxu0 0
        %845 = vmatpush.bf16.xpose.msra.mxu0 0
        %846 = vmatpush.bf16.xpose.msra.mxu0 0
        %847 = vmatpush.bf16.xpose.msra.mxu0 0
        %848 = vmatpush.bf16.xpose.msra.mxu0 0
        %849 = vmatpush.bf16.xpose.msra.mxu0 %v840
        %850 = vmatmul.bf16.gmra.mxu0 %v837
        %v851 = vpop.f32.mrf.mxu0
        %v852 = vadd.f32 %v830, %v851
        %v853 = vpop.f32.mrf.mxu0
        %854 = vdwg.mxu0
        %v855 = vsel %vm590, %v852, -inf
        %856 = vmax.xlane.f32.xlu0 %v855
        %v857 = vpop.xlane.xlu0 %856
        %v858 = vsub.f32 %v852, %v857
        %v859 = vmul.f32 %v858, 1.442695
        %v860 = vpow.pop %v859
        %v861 = vsel %vm590, %v860, 0.0
        %862 = vadd.xlane.f32.xlu0 %v861
        %v863 = vpop.xlane.xlu0 %862
        %v864 = vrcp.pop %v863
        %v865 = vmul.f32 %v860, %v864
        %v866 = vpack.c.bf16 %v865, %v865
        %867 = vrot.lane.b32.xlu0 %v833, 64
        %v868 = vpop.permute.xlu0 %867
        %v870 = vsel %vm590, %v866, 0
        %v873 = vsel %vm627, %v868, 0
        %875 = vmatpush.bf16.msra.mxu0 0
        %876 = vmatpush.bf16.msra.mxu0 0
        %877 = vmatpush.bf16.msra.mxu0 0
        %878 = vmatpush.bf16.msra.mxu0 0
        %879 = vmatpush.bf16.msra.mxu0 0
        %880 = vmatpush.bf16.msra.mxu0 0
        %881 = vmatpush.bf16.msra.mxu0 0
        %882 = vmatpush.bf16.msra.mxu0 %v873
        %883 = vmatmul.bf16.gmra.mxu0 %v870
        %v884 = vpop.f32.mrf.mxu0
        %v885 = vadd.f32 0.0, %v884
        %v886 = vpop.f32.mrf.mxu0
        %887 = vdwg.mxu0
        %888 = vrot.lane.b32.xlu0 %v833, 120
        %v889 = vpop.permute.xlu0 %888
        %890 = vrot.lane.b32.xlu0 %v833, 88
        %v891 = vpop.permute.xlu0 %890
        %v893 = vsel %vm590, %v889, 0
        %v896 = vsel %vm590, %v891, 0
        %898 = vmatpush.bf16.xpose.msra.mxu0 0
        %899 = vmatpush.bf16.xpose.msra.mxu0 0
        %900 = vmatpush.bf16.xpose.msra.mxu0 0
        %901 = vmatpush.bf16.xpose.msra.mxu0 0
        %902 = vmatpush.bf16.xpose.msra.mxu0 0
        %903 = vmatpush.bf16.xpose.msra.mxu0 0
        %904 = vmatpush.bf16.xpose.msra.mxu0 0
        %905 = vmatpush.bf16.xpose.msra.mxu0 %v896
        %906 = vmatmul.bf16.gmra.mxu0 %v893
        %v907 = vpop.f32.mrf.mxu0
        %v908 = vadd.f32 %v830, %v907
        %v909 = vpop.f32.mrf.mxu0
        %910 = vdwg.mxu0
        %v911 = vsel %vm590, %v908, -inf
        %912 = vmax.xlane.f32.xlu0 %v911
        %v913 = vpop.xlane.xlu0 %912
        %v914 = vsub.f32 %v908, %v913
        %v915 = vmul.f32 %v914, 1.442695
        %v916 = vpow.pop %v915
        %v917 = vsel %vm590, %v916, 0.0
        %918 = vadd.xlane.f32.xlu0 %v917
        %v919 = vpop.xlane.xlu0 %918
        %v920 = vrcp.pop %v919
        %v921 = vmul.f32 %v916, %v920
        %v922 = vpack.c.bf16 %v921, %v921
        %923 = vrot.lane.b32.xlu0 %v833, 56
        %v924 = vpop.permute.xlu0 %923
        %v926 = vsel %vm590, %v922, 0
        %v929 = vsel %vm627, %v924, 0
        %931 = vmatpush.bf16.msra.mxu0 0
        %932 = vmatpush.bf16.msra.mxu0 0
        %933 = vmatpush.bf16.msra.mxu0 0
        %934 = vmatpush.bf16.msra.mxu0 0
        %935 = vmatpush.bf16.msra.mxu0 0
        %936 = vmatpush.bf16.msra.mxu0 0
        %937 = vmatpush.bf16.msra.mxu0 0
        %938 = vmatpush.bf16.msra.mxu0 %v929
        %939 = vmatmul.bf16.gmra.mxu0 %v926
        %v940 = vpop.f32.mrf.mxu0
        %v941 = vadd.f32 0.0, %v940
        %v942 = vpop.f32.mrf.mxu0
        %943 = vdwg.mxu0
        %944 = vrot.lane.b32.xlu0 %v833, 112
        %v945 = vpop.permute.xlu0 %944
        %946 = vrot.lane.b32.xlu0 %v833, 80
        %v947 = vpop.permute.xlu0 %946
        %v949 = vsel %vm590, %v945, 0
        %v952 = vsel %vm590, %v947, 0
        %954 = vmatpush.bf16.xpose.msra.mxu0 0
        %955 = vmatpush.bf16.xpose.msra.mxu0 0
        %956 = vmatpush.bf16.xpose.msra.mxu0 0
        %957 = vmatpush.bf16.xpose.msra.mxu0 0
        %958 = vmatpush.bf16.xpose.msra.mxu0 0
        %959 = vmatpush.bf16.xpose.msra.mxu0 0
        %960 = vmatpush.bf16.xpose.msra.mxu0 0
        %961 = vmatpush.bf16.xpose.msra.mxu0 %v952
        %962 = vmatmul.bf16.gmra.mxu0 %v949
        %v963 = vpop.f32.mrf.mxu0
        %v964 = vadd.f32 %v830, %v963
        %v965 = vpop.f32.mrf.mxu0
        %966 = vdwg.mxu0
        %v967 = vsel %vm590, %v964, -inf
        %968 = vmax.xlane.f32.xlu0 %v967
        %v969 = vpop.xlane.xlu0 %968
        %v970 = vsub.f32 %v964, %v969
        %v971 = vmul.f32 %v970, 1.442695
        %v972 = vpow.pop %v971
        %v973 = vsel %vm590, %v972, 0.0
        %974 = vadd.xlane.f32.xlu0 %v973
        %v975 = vpop.xlane.xlu0 %974
        %v976 = vrcp.pop %v975
        %v977 = vmul.f32 %v972, %v976
        %v978 = vpack.c.bf16 %v977, %v977
        %979 = vrot.lane.b32.xlu0 %v833, 48
        %v980 = vpop.permute.xlu0 %979
        %v982 = vsel %vm590, %v978, 0
        %v985 = vsel %vm627, %v980, 0
        %987 = vmatpush.bf16.msra.mxu0 0
        %988 = vmatpush.bf16.msra.mxu0 0
        %989 = vmatpush.bf16.msra.mxu0 0
        %990 = vmatpush.bf16.msra.mxu0 0
        %991 = vmatpush.bf16.msra.mxu0 0
        %992 = vmatpush.bf16.msra.mxu0 0
        %993 = vmatpush.bf16.msra.mxu0 0
        %994 = vmatpush.bf16.msra.mxu0 %v985
        %995 = vmatmul.bf16.gmra.mxu0 %v982
        %v996 = vpop.f32.mrf.mxu0
        %v997 = vadd.f32 0.0, %v996
        %v998 = vpop.f32.mrf.mxu0
        %999 = vdwg.mxu0
        %1000 = vrot.lane.b32.xlu0 %v833, 104
        %v1001 = vpop.permute.xlu0 %1000
        %1002 = vrot.lane.b32.xlu0 %v833, 72
        %v1003 = vpop.permute.xlu0 %1002
        %v1005 = vsel %vm590, %v1001, 0
        %v1008 = vsel %vm590, %v1003, 0
        %1010 = vmatpush.bf16.xpose.msra.mxu0 0
        %1011 = vmatpush.bf16.xpose.msra.mxu0 0
        %1012 = vmatpush.bf16.xpose.msra.mxu0 0
        %1013 = vmatpush.bf16.xpose.msra.mxu0 0
        %1014 = vmatpush.bf16.xpose.msra.mxu0 0
        %1015 = vmatpush.bf16.xpose.msra.mxu0 0
        %1016 = vmatpush.bf16.xpose.msra.mxu0 0
        %1017 = vmatpush.bf16.xpose.msra.mxu0 %v1008
        %1018 = vmatmul.bf16.gmra.mxu0 %v1005
        %v1019 = vpop.f32.mrf.mxu0
        %v1020 = vadd.f32 %v830, %v1019
        %v1021 = vpop.f32.mrf.mxu0
        %1022 = vdwg.mxu0
        %v1023 = vsel %vm590, %v1020, -inf
        %1024 = vmax.xlane.f32.xlu0 %v1023
        %v1025 = vpop.xlane.xlu0 %1024
        %v1026 = vsub.f32 %v1020, %v1025
        %v1027 = vmul.f32 %v1026, 1.442695
        %v1028 = vpow.pop %v1027
        %v1029 = vsel %vm590, %v1028, 0.0
        %1030 = vadd.xlane.f32.xlu0 %v1029
        %v1031 = vpop.xlane.xlu0 %1030
        %v1032 = vrcp.pop %v1031
        %v1033 = vmul.f32 %v1028, %v1032
        %v1034 = vpack.c.bf16 %v1033, %v1033
        %1035 = vrot.lane.b32.xlu0 %v833, 40
        %v1036 = vpop.permute.xlu0 %1035
        %v1038 = vsel %vm590, %v1034, 0
        %v1041 = vsel %vm627, %v1036, 0
        %1043 = vmatpush.bf16.msra.mxu0 0
        %1044 = vmatpush.bf16.msra.mxu0 0
        %1045 = vmatpush.bf16.msra.mxu0 0
        %1046 = vmatpush.bf16.msra.mxu0 0
        %1047 = vmatpush.bf16.msra.mxu0 0
        %1048 = vmatpush.bf16.msra.mxu0 0
        %1049 = vmatpush.bf16.msra.mxu0 0
        %1050 = vmatpush.bf16.msra.mxu0 %v1041
        %1051 = vmatmul.bf16.gmra.mxu0 %v1038
        %v1052 = vpop.f32.mrf.mxu0
        %v1053 = vadd.f32 0.0, %v1052
        %v1054 = vpop.f32.mrf.mxu0
        %1055 = vdwg.mxu0
        %1057 = vrot.lane.b32.xlu0 %v941, 8
        %v1058 = vpop.permute.xlu0 %1057
        %1061 = vrot.lane.b32.xlu0 %v997, 16
        %v1062 = vpop.permute.xlu0 %1061
        %1065 = vrot.lane.b32.xlu0 %v1053, 24
        %v1066 = vpop.permute.xlu0 %1065
        %v1068 = vsel %vm590, %v885, %v1058
        %v1069 = vsel %vm825, %v1068, %v1062
        %v1070 = vsel %vm827, %v1069, %v1066
        %v1071 = vld [vmem:[%s511] sm:$0x3f]
        %v1072 = vpack.c.bf16 %v1070, %v828
        %v1073 = vld [vmem:[%s494] sm:$0xf]
        %v1074 = vld [vmem:[%s494 + $0x4] sm:$0xf]
        %v1075 = vld [vmem:[%s494 + $0x8] sm:$0xf]
        %v1076 = vld [vmem:[%s494 + $0xc] sm:$0xf]
        %v1077 = vperm.slane %v1071, 0
        %v1082 = vunpack.c.l.b16 %v1073
        %v1083 = vunpack.c.l.b16 %v1074
        %v1084 = vunpack.c.l.b16 %v1075
        %v1085 = vunpack.c.l.b16 %v1076
        %v1086 = vpack.c.b16 %v1083, %v1082
        %v1087 = vpack.c.b16 %v1085, %v1084
        %v1091 = vsel %vm564, %v1072, 0
        %1093 = vmatpush.bf16.msra.mxu0 0
        %1094 = vmatpush.bf16.msra.mxu0 0
        %1095 = vmatpush.bf16.msra.mxu0 0
        %1096 = vmatpush.bf16.msra.mxu0 0
        %1097 = vmatpush.bf16.msra.mxu0 0
        %1098 = vmatpush.bf16.msra.mxu0 0
        %1099 = vmatpush.bf16.msra.mxu0 %v1087
        %1100 = vmatpush.bf16.msra.mxu0 %v1086
        %1101 = vmatmul.bf16.gmra.mxu0 %v1091
        %v1102 = vpop.f32.mrf.mxu0
        %v1103 = vadd.f32 %v1077, %v1102
        %v1104 = vpop.f32.mrf.mxu0
        %v1105 = vadd.f32 %v1077, %v1104
        %1106 = vdwg.mxu0
        %v1107 = vsel %vm564, %v1103, 0.0
        %1108 = vadd.xlane.f32.xlu0 %v1107
        %v1109 = vpop.xlane.xlu0 %1108
        %v1110 = vsel %vm564, %v1105, 0.0
        %1111 = vadd.xlane.f32.xlu0 %v1110
        %v1112 = vpop.xlane.xlu0 %1111
        %v1113 = vrcp.pop 32.0
        %v1114 = vmul.f32 32.0, %v1113
        %v1115 = vsub.f32 1.0, %v1114
        %v1116 = vmul.f32 %v1113, %v1115
        %v1117 = vadd.f32 %v1113, %v1116
        %vm1118 = vweird.f32 %v1113
        %v1119 = vsel %vm1118, %v1113, %v1117
        %v1120 = vmul.f32 %v1109, %v1119
        %v1121 = vmul.f32 %v1112, %v1119
        %v1122 = vsub.f32 %v1103, %v1120
        %v1123 = vsub.f32 %v1105, %v1121
        %v1124 = vmul.f32 %v1122, %v1122
        %v1125 = vmul.f32 %v1123, %v1123
        %v1126 = vsel %vm564, %v1124, 0.0
        %1127 = vadd.xlane.f32.xlu0 %v1126
        %v1128 = vpop.xlane.xlu0 %1127
        %v1129 = vsel %vm564, %v1125, 0.0
        %1130 = vadd.xlane.f32.xlu0 %v1129
        %v1131 = vpop.xlane.xlu0 %1130
        %v1132 = vmul.f32 %v1128, %v1119
        %v1133 = vmul.f32 %v1131, %v1119
        %v1134 = vadd.f32 %v1132, 1e-05
        %v1135 = vadd.f32 %v1133, 1e-05
        %v1136 = vrsqrt.pop %v1134
        %v1137 = vmul.f32 %v1136, %v1134
        %v1138 = vmul.f32 %v1137, %v1136
        %v1139 = vmul.f32 0.5, %v1138
        %v1140 = vsub.f32 1.5, %v1139
        %v1141 = vmul.f32 %v1136, %v1140
        %vm1142 = vweird.f32 %v1134
        %vm1143 = vweird.f32 %v1136
        %vm1144 = vmor %vm1142, %vm1143
        %v1145 = vsel %vm1144, %v1136, %v1141
        %v1146 = vrsqrt.pop %v1135
        %v1147 = vmul.f32 %v1146, %v1135
        %v1148 = vmul.f32 %v1147, %v1146
        %v1149 = vmul.f32 0.5, %v1148
        %v1150 = vsub.f32 1.5, %v1149
        %v1151 = vmul.f32 %v1146, %v1150
        %vm1152 = vweird.f32 %v1135
        %vm1153 = vweird.f32 %v1146
        %vm1154 = vmor %vm1152, %vm1153
        %v1155 = vsel %vm1154, %v1146, %v1151
        %v1156 = vmul.f32 %v1122, %v1145
        %v1157 = vmul.f32 %v1123, %v1155
        %v1158 = vperm.slane %v1071, 1
        %v1159 = vmul.f32 %v1156, %v1158
        %v1160 = vmul.f32 %v1157, %v1158
        %v1161 = vperm.slane %v1071, 2
        %v1162 = vadd.f32 %v1159, %v1161
        %v1163 = vadd.f32 %v1160, %v1161
        %v1164 = vld [vmem:[#allocation2] sm:$0xff]
        %v1165 = vld [vmem:[#allocation2 + $0x8] sm:$0xff]
        %v1166 = vadd.f32 %v1162, %v1164
        %v1167 = vadd.f32 %v1163, %v1165
        %v1168 = vpack.c.bf16 %v1167, %v1166
        %v1169 = vld [vmem:[%s499] sm:$0xf]
        %v1170 = vld [vmem:[%s499 + $0x4] sm:$0xf]
        %v1171 = vld [vmem:[%s499 + $0x8] sm:$0xf]
        %v1172 = vld [vmem:[%s499 + $0xc] sm:$0xf]
        %v1173 = vld [vmem:[%s502] sm:$0x1]
        %v1175 = vperm.slane %v1173, 0
        %v1181 = vunpack.c.l.b16 %v1169
        %v1182 = vunpack.c.l.b16 %v1170
        %v1183 = vunpack.c.l.b16 %v1171
        %v1184 = vunpack.c.l.b16 %v1172
        %v1185 = vpack.c.b16 %v1182, %v1181
        %v1186 = vpack.c.b16 %v1184, %v1183
        %v1190 = vsel %vm564, %v1168, 0
        %1192 = vmatpush.bf16.msra.mxu0 0
        %1193 = vmatpush.bf16.msra.mxu0 0
        %1194 = vmatpush.bf16.msra.mxu0 0
        %1195 = vmatpush.bf16.msra.mxu0 0
        %1196 = vmatpush.bf16.msra.mxu0 0
        %1197 = vmatpush.bf16.msra.mxu0 0
        %1198 = vmatpush.bf16.msra.mxu0 %v1186
        %1199 = vmatpush.bf16.msra.mxu0 %v1185
        %1200 = vmatmul.bf16.gmra.mxu0 %v1190
        %v1201 = vpop.f32.mrf.mxu0
        %v1202 = vadd.f32 %v1175, %v1201
        %v1203 = vpop.f32.mrf.mxu0
        %v1204 = vadd.f32 %v1175, %v1203
        %1205 = vdwg.mxu0
        %v1206 = vmax.f32 %v1202, 0.0
        %v1207 = vmax.f32 %v1204, 0.0
        %v1208 = vpack.c.bf16 %v1207, %v1206
        %v1209 = vld [vmem:[%s507] sm:$0xf]
        %v1210 = vld [vmem:[%s507 + $0x4] sm:$0xf]
        %v1211 = vld [vmem:[%s507 + $0x8] sm:$0xf]
        %v1212 = vld [vmem:[%s507 + $0xc] sm:$0xf]
        %v1213 = vld [vmem:[%s507 + $0x10] sm:$0xf]
        %v1214 = vld [vmem:[%s507 + $0x14] sm:$0xf]
        %v1215 = vld [vmem:[%s507 + $0x18] sm:$0xf]
        %v1216 = vld [vmem:[%s507 + $0x1c] sm:$0xf]
        %v1217 = vld [vmem:[%s507 + $0x20] sm:$0xf]
        %v1218 = vld [vmem:[%s507 + $0x24] sm:$0xf]
        %v1219 = vld [vmem:[%s507 + $0x28] sm:$0xf]
        %v1220 = vld [vmem:[%s507 + $0x2c] sm:$0xf]
        %v1221 = vld [vmem:[%s507 + $0x30] sm:$0xf]
        %v1222 = vld [vmem:[%s507 + $0x34] sm:$0xf]
        %v1223 = vld [vmem:[%s507 + $0x38] sm:$0xf]
        %v1224 = vld [vmem:[%s507 + $0x3c] sm:$0xf]
        %v1225 = vperm.slane %v1071, 5
        %v1242 = vunpack.c.l.b16 %v1209
        %v1243 = vunpack.c.l.b16 %v1210
        %v1244 = vunpack.c.l.b16 %v1211
        %v1245 = vunpack.c.l.b16 %v1212
        %v1246 = vunpack.c.l.b16 %v1213
        %v1247 = vunpack.c.l.b16 %v1214
        %v1248 = vunpack.c.l.b16 %v1215
        %v1249 = vunpack.c.l.b16 %v1216
        %v1250 = vunpack.c.l.b16 %v1217
        %v1251 = vunpack.c.l.b16 %v1218
        %v1252 = vunpack.c.l.b16 %v1219
        %v1253 = vunpack.c.l.b16 %v1220
        %v1254 = vunpack.c.l.b16 %v1221
        %v1255 = vunpack.c.l.b16 %v1222
        %v1256 = vunpack.c.l.b16 %v1223
        %v1257 = vunpack.c.l.b16 %v1224
        %v1258 = vpack.c.b16 %v1243, %v1242
        %v1259 = vpack.c.b16 %v1245, %v1244
        %v1260 = vpack.c.b16 %v1247, %v1246
        %v1261 = vpack.c.b16 %v1249, %v1248
        %v1262 = vpack.c.b16 %v1251, %v1250
        %v1263 = vpack.c.b16 %v1253, %v1252
        %v1264 = vpack.c.b16 %v1255, %v1254
        %v1265 = vpack.c.b16 %v1257, %v1256
        %1274 = vmatpush.bf16.msra.mxu0 %v1265
        %1275 = vmatpush.bf16.msra.mxu0 %v1264
        %1276 = vmatpush.bf16.msra.mxu0 %v1263
        %1277 = vmatpush.bf16.msra.mxu0 %v1262
        %1278 = vmatpush.bf16.msra.mxu0 %v1261
        %1279 = vmatpush.bf16.msra.mxu0 %v1260
        %1280 = vmatpush.bf16.msra.mxu0 %v1259
        %1281 = vmatpush.bf16.msra.mxu0 %v1258
        %1282 = vmatmul.bf16.gmra.mxu0 %v1208
        %v1283 = vpop.f32.mrf.mxu0
        %v1284 = vadd.f32 %v1225, %v1283
        %v1285 = vpop.f32.mrf.mxu0
        %v1286 = vadd.f32 %v1225, %v1285
        %1287 = vdwg.mxu0
        %v1288 = vsel %vm564, %v1284, 0.0
        %1289 = vadd.xlane.f32.xlu0 %v1288
        %v1290 = vpop.xlane.xlu0 %1289
        %v1291 = vsel %vm564, %v1286, 0.0
        %1292 = vadd.xlane.f32.xlu0 %v1291
        %v1293 = vpop.xlane.xlu0 %1292
        %v1294 = vmul.f32 %v1290, %v1119
        %v1295 = vmul.f32 %v1293, %v1119
        %v1296 = vsub.f32 %v1284, %v1294
        %v1297 = vsub.f32 %v1286, %v1295
        %v1298 = vmul.f32 %v1296, %v1296
        %v1299 = vmul.f32 %v1297, %v1297
        %v1300 = vsel %vm564, %v1298, 0.0
        %1301 = vadd.xlane.f32.xlu0 %v1300
        %v1302 = vpop.xlane.xlu0 %1301
        %v1303 = vsel %vm564, %v1299, 0.0
        %1304 = vadd.xlane.f32.xlu0 %v1303
        %v1305 = vpop.xlane.xlu0 %1304
        %v1306 = vmul.f32 %v1302, %v1119
        %v1307 = vmul.f32 %v1305, %v1119
        %v1308 = vadd.f32 %v1306, 1e-05
        %v1309 = vadd.f32 %v1307, 1e-05
        %v1310 = vrsqrt.pop %v1308
        %v1311 = vmul.f32 %v1310, %v1308
        %v1312 = vmul.f32 %v1311, %v1310
        %v1313 = vmul.f32 0.5, %v1312
        %v1314 = vsub.f32 1.5, %v1313
        %v1315 = vmul.f32 %v1310, %v1314
        %vm1316 = vweird.f32 %v1308
        %vm1317 = vweird.f32 %v1310
        %vm1318 = vmor %vm1316, %vm1317
        %v1319 = vsel %vm1318, %v1310, %v1315
        %v1320 = vrsqrt.pop %v1309
        %v1321 = vmul.f32 %v1320, %v1309
        %v1322 = vmul.f32 %v1321, %v1320
        %v1323 = vmul.f32 0.5, %v1322
        %v1324 = vsub.f32 1.5, %v1323
        %v1325 = vmul.f32 %v1320, %v1324
        %vm1326 = vweird.f32 %v1309
        %vm1327 = vweird.f32 %v1320
        %vm1328 = vmor %vm1326, %vm1327
        %v1329 = vsel %vm1328, %v1320, %v1325
        %v1330 = vmul.f32 %v1296, %v1319
        %v1331 = vmul.f32 %v1297, %v1329
        %v1332 = vperm.slane %v1071, 3
        %v1333 = vmul.f32 %v1330, %v1332
        %v1334 = vmul.f32 %v1331, %v1332
        %v1335 = vperm.slane %v1071, 4
        %v1336 = vadd.f32 %v1333, %v1335
        %v1337 = vadd.f32 %v1334, %v1335
        %v1338 = vadd.f32 %v1336, %v1166
        %v1339 = vadd.f32 %v1337, %v1167
        %1340 = vst.msk [vmem:[#allocation2] sm:$0xff] %vm564, %v1338
        %1341 = vst.msk [vmem:[#allocation2 + $0x8] sm:$0xff] %vm564, %v1339
        %p1342 = scmp.eq.s32.totalorder %s27, 1
        // Predicated region
        $region65: #{tpu_custom_call.1} parent=59 // pred_check
          %p1343 = pneg %p1342
        $region66: #{tpu_custom_call.1} parent=59 // pred_check_branch
          %1345 = sbr.rel (%p1343) target = $region68
        $region67: #{tpu_custom_call.1} parent=59 // pred_region
          %v1346 = vld [vmem:[%s9] sm:$0x3]
          %v1347 = vsel %vm564, %v1338, 0.0
          %1348 = vadd.xlane.f32.xlu0 %v1347
          %v1349 = vpop.xlane.xlu0 %1348
          %v1350 = vsel %vm564, %v1339, 0.0
          %1351 = vadd.xlane.f32.xlu0 %v1350
          %v1352 = vpop.xlane.xlu0 %1351
          %v1353 = vmul.f32 %v1349, %v1119
          %v1354 = vmul.f32 %v1352, %v1119
          %v1355 = vsub.f32 %v1338, %v1353
          %v1356 = vsub.f32 %v1339, %v1354
          %v1357 = vmul.f32 %v1355, %v1355
          %v1358 = vmul.f32 %v1356, %v1356
          %v1359 = vsel %vm564, %v1357, 0.0
          %1360 = vadd.xlane.f32.xlu0 %v1359
          %v1361 = vpop.xlane.xlu0 %1360
          %v1362 = vsel %vm564, %v1358, 0.0
          %1363 = vadd.xlane.f32.xlu0 %v1362
          %v1364 = vpop.xlane.xlu0 %1363
          %v1365 = vmul.f32 %v1361, %v1119
          %v1366 = vmul.f32 %v1364, %v1119
          %v1367 = vadd.f32 %v1365, 1e-05
          %v1368 = vadd.f32 %v1366, 1e-05
          %v1369 = vrsqrt.pop %v1367
          %v1370 = vmul.f32 %v1369, %v1367
          %v1371 = vmul.f32 %v1370, %v1369
          %v1372 = vmul.f32 0.5, %v1371
          %v1373 = vsub.f32 1.5, %v1372
          %v1374 = vmul.f32 %v1369, %v1373
          %vm1375 = vweird.f32 %v1367
          %vm1376 = vweird.f32 %v1369
          %vm1377 = vmor %vm1375, %vm1376
          %v1378 = vsel %vm1377, %v1369, %v1374
          %v1379 = vrsqrt.pop %v1368
          %v1380 = vmul.f32 %v1379, %v1368
          %v1381 = vmul.f32 %v1380, %v1379
          %v1382 = vmul.f32 0.5, %v1381
          %v1383 = vsub.f32 1.5, %v1382
          %v1384 = vmul.f32 %v1379, %v1383
          %vm1385 = vweird.f32 %v1368
          %vm1386 = vweird.f32 %v1379
          %vm1387 = vmor %vm1385, %vm1386
          %v1388 = vsel %vm1387, %v1379, %v1384
          %v1389 = vmul.f32 %v1355, %v1378
          %v1390 = vmul.f32 %v1356, %v1388
          %v1391 = vperm.slane %v1346, 0
          %v1392 = vmul.f32 %v1389, %v1391
          %v1393 = vmul.f32 %v1390, %v1391
          %v1394 = vperm.slane %v1346, 1
          %v1395 = vadd.f32 %v1392, %v1394
          %v1396 = vadd.f32 %v1393, %v1394
          %1397 = vst.msk [vmem:[#allocation5] sm:$0xff] %vm564, %v1395
          %1398 = vst.msk [vmem:[#allocation5 + $0x8] sm:$0xff] %vm564, %v1396
        $region68: #{tpu_custom_call.1} parent=59 // pred_fallthru
          _
        // Predicated region
        $region69: #{tpu_custom_call.1} parent=59 // pred_check
          %p1399 = pneg %p307
        $region70: #{tpu_custom_call.1} parent=59 // pred_check_branch
          %1401 = sbr.rel (%p1399) target = $region72
        $region71: #{tpu_custom_call.1} parent=59 // pred_region
          %s1402 = smul.u32 2, %s26
          %1404 = vsyncadd [#allocation6], 0
          %s1405 = smul.addr %s1402, 8
          %s1406 = scalar_lea.hbm %s10, %s1405
          %s1407 = sshll.u32 [#allocation5], 4
          %s1408 = int_to_ptr.vmem [resolvable:$true] %s1407
          %s1409 = sshll.u32 %s1406, 4
          %s1410 = int_to_ptr.hbm [resolvable:$true] %s1409
          %1415 = dma.vmem_to_hbm [thread:$0]  %s1408, 256, %s1410, [#allocation6], 128, 128, 8
        $region72: #{tpu_custom_call.1} parent=59 // pred_fallthru
          _
        // Predicated region
        $region73: #{tpu_custom_call.1} parent=59 // pred_check
          %p1416 = pneg %p307
        $region74: #{tpu_custom_call.1} parent=59 // pred_check_branch
          %1418 = sbr.rel (%p1416) target = $region76
        $region75: #{tpu_custom_call.1} parent=59 // pred_region
          %1420 = dma.done [#allocation6], 256
        $region76: #{tpu_custom_call.1} parent=59 // pred_fallthru
          _
      $region60: #{tpu_custom_call.1} parent=5 // pred_fallthru
        _
      %p1421 = scmp.le.s32.totalorder 2, %s17
      // Predicated region
      $region77: #{tpu_custom_call.1} parent=5 // pred_check
        %p1422 = pneg %p1421
      $region78: #{tpu_custom_call.1} parent=5 // pred_check_branch
        %1424 = sbr.rel (%p1422) target = $region80
      $region79: #{tpu_custom_call.1} parent=5 // pred_region
        %s1425 = ssub.s32 %s17, 2
      $region80: #{tpu_custom_call.1} parent=5 // pred_fallthru
        _
    $region6: #{tpu_custom_call.1} parent=1 // loop_footer
      %s21 = sadd.s32 1, %s17
    $region7: #{tpu_custom_call.1} parent=1 // loop_footer_branch
      %16 = sbr.rel target = $region3
    $region8: #{tpu_custom_call.1} parent=1 // loop_exit
      _
    %1426 = vsyncpa [#allocation6], 1
    %s1427 = scalar_lea.sflag [#allocation6], 1
    %1428 = vsyncpa %s1427, 1

</llo_original>
